<compile_context>
chip_gen: v7x
topology: tpu7x:2x2x1
jax: 0.10.0
libtpu: 0.0.40
codegen_flags: <defaults>
</compile_context>

<pallas_src>
import jax
import jax.numpy as jnp
from jax.experimental import pallas as pl
from jax.experimental.pallas import tpu as pltpu

# ----------------------------- model config ---------------------------------
EMBEDDING_SIZE = 32
HIDDEN_SIZE_LIST = [64, 48]
MID_HIDDEN = 16
BATCH = 256        # bulk2space generates thousands of cells; keep a realistic batch
TM = 128           # batch rows per grid step (fills a 128x128 MXU tile on all chips)
PAD = 128          # every feature axis is zero-padded to one full lane group

ENC_SIZES = [EMBEDDING_SIZE] + HIDDEN_SIZE_LIST + [MID_HIDDEN * 2]
DEC_SIZES = [EMBEDDING_SIZE] + HIDDEN_SIZE_LIST + [MID_HIDDEN]
ENC_LAYER_DIMS = [(ENC_SIZES[i], ENC_SIZES[i + 1]) for i in range(len(ENC_SIZES) - 1)]
# decoder ModuleList is built reversed: maps DEC_SIZES[i] -> DEC_SIZES[i-1]
DEC_LAYER_DIMS = [(DEC_SIZES[i], DEC_SIZES[i - 1])
                  for i in range(len(DEC_SIZES) - 1, 0, -1)]

# packed-slab layout: [enc0, enc1, enc_mu, enc_sigma, dec0, dec1, dec2]
N_ENC_HIDDEN = len(ENC_LAYER_DIMS) - 1        # encoder layers followed by ReLU (2)
N_DEC = len(DEC_LAYER_DIMS)                   # decoder layers (3)
N_SLABS = N_ENC_HIDDEN + 2 + N_DEC            # 7


# ------------------------------ kernel ---------------------------------------
def _vae_kernel(x_ref, noise_ref, w_ref, b_ref, xhat_ref, klrow_ref):
    """One (TM, 128) batch tile: encoder -> reparameterize -> decoder -> row-KL."""
    # ---- encoder hidden layers: Linear + ReLU (bf16 MXU, f32 accumulate) ----
    h = x_ref[...]                                              # (TM, 128) bf16
    for i in range(N_ENC_HIDDEN):
        h = jnp.dot(h, w_ref[i], preferred_element_type=jnp.float32) + b_ref[i]
        h = jnp.maximum(h, 0.0).astype(jnp.bfloat16)

    # ---- final encoder layer split into mu / sigma weights (no lane slicing) ----
    mu = jnp.dot(h, w_ref[N_ENC_HIDDEN],
                 preferred_element_type=jnp.float32) + b_ref[N_ENC_HIDDEN]
    sigma = jnp.dot(h, w_ref[N_ENC_HIDDEN + 1],
                    preferred_element_type=jnp.float32) + b_ref[N_ENC_HIDDEN + 1]

    # ---- reparameterization (module quirk preserved: noise + mu * exp(sigma)**0.5)
    hidden = noise_ref[...] + mu * jnp.exp(0.5 * sigma)

    # ---- per-row KL partial sums (padded lanes give exp(0)+0-1-0 == 0 exactly) ----
    kl_terms = jnp.exp(sigma) + mu * mu - 1.0 - sigma
    kl_row = jnp.sum(kl_terms, axis=-1, keepdims=True)          # (TM, 1)
    klrow_ref[...] = jnp.broadcast_to(kl_row, (kl_row.shape[0], PAD))  # lane-dense

    # ---- decoder: Linear + ReLU on every layer ----
    y = hidden.astype(jnp.bfloat16)
    for j in range(N_DEC):
        i = N_ENC_HIDDEN + 2 + j
        y = jnp.dot(y, w_ref[i], preferred_element_type=jnp.float32) + b_ref[i]
        y = jnp.maximum(y, 0.0)
        if j != N_DEC - 1:
            y = y.astype(jnp.bfloat16)
    xhat_ref[...] = y                                            # f32, lane-dense


# ------------------------------ wrapper ---------------------------------------
def vae_forward(x, noise, w_packed, b_packed, *, tm=TM):
    """x: (N, emb) f32, noise: (N, mid) f32. Returns (x_hat (N, emb), kl scalar)."""
    n, emb = x.shape
    mid = noise.shape[1]
    n_blocks = pl.cdiv(n, tm)
    n_pad = n_blocks * tm

    # lane-pad features to 128 and row-pad batch to a multiple of tm (layout plumbing)
    x_p = jnp.zeros((n_pad, PAD), jnp.bfloat16).at[:n, :emb].set(
        x.astype(jnp.bfloat16))
    noise_p = jnp.zeros((n_pad, PAD), jnp.float32).at[:n, :mid].set(noise)

    row_spec = pl.BlockSpec((tm, PAD), lambda i: (i, 0))
    x_hat_p, kl_rows = pl.pallas_call(
        _vae_kernel,
        grid=(n_blocks,),
        in_specs=[
            row_spec,                                                # x (streamed)
            row_spec,                                                # noise (streamed)
            pl.BlockSpec((N_SLABS, PAD, PAD), lambda i: (0, 0, 0)),  # weights resident
            pl.BlockSpec((N_SLABS, PAD), lambda i: (0, 0)),          # biases resident
        ],
        out_specs=(row_spec, row_spec),
        out_shape=(
            jax.ShapeDtypeStruct((n_pad, PAD), jnp.float32),   # x_hat (lane-padded)
            jax.ShapeDtypeStruct((n_pad, PAD), jnp.float32),   # per-row KL partials
        ),
        compiler_params=pltpu.CompilerParams(
            dimension_semantics=("parallel",)),
    )(x_p, noise_p, w_packed, b_packed)

    x_hat = x_hat_p[:n, :emb]
    # original loss scaling: / (x.shape[0] * x.shape[1]) == / (N * embedding_size)
    kl = 0.5 * jnp.sum(kl_rows[:n, 0]) / (n * emb)
    return x_hat, kl


# -------------------------- parameter construction ---------------------------
def init_linear(key, fan_in, fan_out):
    """Mirrors PyTorch nn.Linear default init; weight returned as (in, out)."""
    kw, kb = jax.random.split(key)
    bound = 1.0 / jnp.sqrt(float(fan_in))
    w = jax.random.uniform(kw, (fan_in, fan_out), jnp.float32, -bound, bound)
    b = jax.random.uniform(kb, (fan_out,), jnp.float32, -bound, bound)
    return w, b


def build_params(key):
    enc_params, dec_params = [], []
    for (fi, fo) in ENC_LAYER_DIMS:
        key, sub = jax.random.split(key)
        enc_params.append(init_linear(sub, fi, fo))
    for (fi, fo) in DEC_LAYER_DIMS:
        key, sub = jax.random.split(key)
        dec_params.append(init_linear(sub, fi, fo))
    return enc_params, dec_params


def pack_params(enc_params, dec_params):
    """Zero-pad each layer to a (PAD, PAD) weight / (PAD,) bias slab and stack.

    Weights are cast to bf16 (MXU datapath); biases stay f32. The last encoder
    layer is split into separate mu / sigma slabs so the kernel never slices a
    vreg at lane MID_HIDDEN."""
    def pad_w(w):
        return jnp.zeros((PAD, PAD), jnp.float32).at[:w.shape[0], :w.shape[1]].set(w)

    def pad_b(b):
        return jnp.zeros((PAD,), jnp.float32).at[:b.shape[0]].set(b)

    ws, bs = [], []
    for (w, b) in enc_params[:-1]:
        ws.append(pad_w(w)); bs.append(pad_b(b))
    w_last, b_last = enc_params[-1]
    ws.append(pad_w(w_last[:, :MID_HIDDEN])); bs.append(pad_b(b_last[:MID_HIDDEN]))
    ws.append(pad_w(w_last[:, MID_HIDDEN:])); bs.append(pad_b(b_last[MID_HIDDEN:]))
    for (w, b) in dec_params:
        ws.append(pad_w(w)); bs.append(pad_b(b))

    w_packed = jnp.stack(ws).astype(jnp.bfloat16)   # (N_SLABS, PAD, PAD) bf16
    b_packed = jnp.stack(bs)                        # (N_SLABS, PAD)      f32
    return w_packed, b_packed


# ------------------------------ reference (plain JAX) -------------------------
def vae_reference(x, noise, enc_params, dec_params):
    """Mirrors the kernel numerics (bf16 matmul inputs, f32 accumulate/elementwise)."""
    def lin(h, w, b):
        return jnp.dot(h.astype(jnp.bfloat16), w.astype(jnp.bfloat16),
                       preferred_element_type=jnp.float32) + b

    h = x
    for i, (w, b) in enumerate(enc_params):
        h = lin(h, w, b)
        if i != len(enc_params) - 1:
            h = jnp.maximum(h, 0.0)
    mu, sigma = h[:, :MID_HIDDEN], h[:, MID_HIDDEN:]
    hidden = noise + mu * jnp.exp(0.5 * sigma)
    kl = 0.5 * jnp.sum(jnp.exp(sigma) + mu ** 2 - 1.0 - sigma) / (
        x.shape[0] * x.shape[1])
    y = hidden
    for (w, b) in dec_params:
        y = jnp.maximum(lin(y, w, b), 0.0)
    return y, kl


# ------------------------------ main ------------------------------------------
if __name__ == "__main__":
    key = jax.random.PRNGKey(0)
    k_x, k_noise, k_params = jax.random.split(key, 3)

    x = jax.random.normal(k_x, (BATCH, EMBEDDING_SIZE), jnp.float32)
    # TODO(synk): torch.randn_like(sigma) is device RNG; standard-normal noise is
    # generated here with jax.random and streamed into the kernel instead.
    noise = jax.random.normal(k_noise, (BATCH, MID_HIDDEN), jnp.float32)

    enc_params, dec_params = build_params(k_params)
    w_packed, b_packed = pack_params(enc_params, dec_params)

    fwd = jax.jit(vae_forward)
    x_hat, kl = fwd(x, noise, w_packed, b_packed)
    x_hat = jax.block_until_ready(x_hat)
    kl = jax.block_until_ready(kl)

    x_hat_ref, kl_ref = vae_reference(x, noise, enc_params, dec_params)
    assert x_hat.shape == (BATCH, EMBEDDING_SIZE)
    assert jnp.allclose(x_hat, x_hat_ref, atol=1e-2, rtol=1e-2), \
        float(jnp.max(jnp.abs(x_hat - x_hat_ref)))
    assert jnp.allclose(kl, kl_ref, atol=1e-2, rtol=1e-2), (float(kl), float(kl_ref))

    print("KERNEL_OK")
</pallas_src>

<mosaic_0001>
module attributes {stable_mosaic.version = 11 : i64} {
  func.func @_vae_kernel(%arg0: i32, %arg1: memref<128x128xbf16, #tpu.memory_space<vmem>>, %arg2: memref<128x128xf32, #tpu.memory_space<vmem>>, %arg3: memref<7x128x128xbf16, #tpu.memory_space<vmem>>, %arg4: memref<7x128xf32, #tpu.memory_space<vmem>>, %arg5: memref<128x128xf32, #tpu.memory_space<vmem>>, %arg6: memref<128x128xf32, #tpu.memory_space<vmem>>) attributes {dimension_semantics = [#tpu.dimension_semantics<parallel>], iteration_bounds = array<i64: 2>, scalar_prefetch = 0 : i64, scratch_operands = 0 : i64, tpu.core_type = #tpu.core_type<tc>, window_params = [{transform_indices = @transform_0, window_bounds = array<i64: 128, 128>}, {transform_indices = @transform_1, window_bounds = array<i64: 128, 128>}, {pipeline_mode = #tpu.pipeline_mode<synchronous>, transform_indices = @transform_2, window_bounds = array<i64: 7, 128, 128>}, {pipeline_mode = #tpu.pipeline_mode<synchronous>, transform_indices = @transform_3, window_bounds = array<i64: 7, 128>}, {transform_indices = @transform_4, window_bounds = array<i64: 128, 128>}, {transform_indices = @transform_5, window_bounds = array<i64: 128, 128>}]} {
    %c0 = arith.constant 0 : index
    %c0_0 = arith.constant 0 : index
    %0 = vector.load %arg1[%c0, %c0_0] : memref<128x128xbf16, #tpu.memory_space<vmem>>, vector<128x128xbf16>
    %c0_1 = arith.constant 0 : index
    %c0_2 = arith.constant 0 : index
    %c0_3 = arith.constant 0 : index
    %1 = vector.load %arg3[%c0_1, %c0_2, %c0_3] : memref<7x128x128xbf16, #tpu.memory_space<vmem>>, vector<1x128x128xbf16>
    %2 = vector.shape_cast %1 : vector<1x128x128xbf16> to vector<128x128xbf16>
    %cst = arith.constant dense<0.000000e+00> : vector<128x128xf32>
    %3 = tpu.matmul %0, %2, %cst {dimension_numbers = #tpu.dot_dimension_numbers<[1], [0], [0], [1], [0, 0, 1, 1], [], []>} : vector<128x128xbf16>, vector<128x128xbf16>, vector<128x128xf32> -> vector<128x128xf32>
    %c0_4 = arith.constant 0 : index
    %c0_5 = arith.constant 0 : index
    %4 = vector.load %arg4[%c0_4, %c0_5] : memref<7x128xf32, #tpu.memory_space<vmem>>, vector<1x128xf32>
    %5 = vector.shape_cast %4 : vector<1x128xf32> to vector<128xf32>
    %6 = vector.shape_cast %5 : vector<128xf32> to vector<1x128xf32>
    %7 = vector.broadcast %6 : vector<1x128xf32> to vector<128x128xf32>
    %8 = arith.addf %3, %7 : vector<128x128xf32>
    %cst_6 = arith.constant 0.000000e+00 : f32
    %9 = vector.broadcast %cst_6 : f32 to vector<128x128xf32>
    %10 = arith.maximumf %8, %9 : vector<128x128xf32>
    %11 = arith.truncf %10 : vector<128x128xf32> to vector<128x128xbf16>
    %c1 = arith.constant 1 : index
    %c0_7 = arith.constant 0 : index
    %c0_8 = arith.constant 0 : index
    %12 = vector.load %arg3[%c1, %c0_7, %c0_8] : memref<7x128x128xbf16, #tpu.memory_space<vmem>>, vector<1x128x128xbf16>
    %13 = vector.shape_cast %12 : vector<1x128x128xbf16> to vector<128x128xbf16>
    %cst_9 = arith.constant dense<0.000000e+00> : vector<128x128xf32>
    %14 = tpu.matmul %11, %13, %cst_9 {dimension_numbers = #tpu.dot_dimension_numbers<[1], [0], [0], [1], [0, 0, 1, 1], [], []>} : vector<128x128xbf16>, vector<128x128xbf16>, vector<128x128xf32> -> vector<128x128xf32>
    %c1_10 = arith.constant 1 : index
    %c0_11 = arith.constant 0 : index
    %15 = vector.load %arg4[%c1_10, %c0_11] : memref<7x128xf32, #tpu.memory_space<vmem>>, vector<1x128xf32>
    %16 = vector.shape_cast %15 : vector<1x128xf32> to vector<128xf32>
    %17 = vector.shape_cast %16 : vector<128xf32> to vector<1x128xf32>
    %18 = vector.broadcast %17 : vector<1x128xf32> to vector<128x128xf32>
    %19 = arith.addf %14, %18 : vector<128x128xf32>
    %cst_12 = arith.constant 0.000000e+00 : f32
    %20 = vector.broadcast %cst_12 : f32 to vector<128x128xf32>
    %21 = arith.maximumf %19, %20 : vector<128x128xf32>
    %22 = arith.truncf %21 : vector<128x128xf32> to vector<128x128xbf16>
    %c2 = arith.constant 2 : index
    %c0_13 = arith.constant 0 : index
    %c0_14 = arith.constant 0 : index
    %23 = vector.load %arg3[%c2, %c0_13, %c0_14] : memref<7x128x128xbf16, #tpu.memory_space<vmem>>, vector<1x128x128xbf16>
    %24 = vector.shape_cast %23 : vector<1x128x128xbf16> to vector<128x128xbf16>
    %cst_15 = arith.constant dense<0.000000e+00> : vector<128x128xf32>
    %25 = tpu.matmul %22, %24, %cst_15 {dimension_numbers = #tpu.dot_dimension_numbers<[1], [0], [0], [1], [0, 0, 1, 1], [], []>} : vector<128x128xbf16>, vector<128x128xbf16>, vector<128x128xf32> -> vector<128x128xf32>
    %c2_16 = arith.constant 2 : index
    %c0_17 = arith.constant 0 : index
    %26 = vector.load %arg4[%c2_16, %c0_17] : memref<7x128xf32, #tpu.memory_space<vmem>>, vector<1x128xf32>
    %27 = vector.shape_cast %26 : vector<1x128xf32> to vector<128xf32>
    %28 = vector.shape_cast %27 : vector<128xf32> to vector<1x128xf32>
    %29 = vector.broadcast %28 : vector<1x128xf32> to vector<128x128xf32>
    %30 = arith.addf %25, %29 : vector<128x128xf32>
    %c3 = arith.constant 3 : index
    %c0_18 = arith.constant 0 : index
    %c0_19 = arith.constant 0 : index
    %31 = vector.load %arg3[%c3, %c0_18, %c0_19] : memref<7x128x128xbf16, #tpu.memory_space<vmem>>, vector<1x128x128xbf16>
    %32 = vector.shape_cast %31 : vector<1x128x128xbf16> to vector<128x128xbf16>
    %cst_20 = arith.constant dense<0.000000e+00> : vector<128x128xf32>
    %33 = tpu.matmul %22, %32, %cst_20 {dimension_numbers = #tpu.dot_dimension_numbers<[1], [0], [0], [1], [0, 0, 1, 1], [], []>} : vector<128x128xbf16>, vector<128x128xbf16>, vector<128x128xf32> -> vector<128x128xf32>
    %c3_21 = arith.constant 3 : index
    %c0_22 = arith.constant 0 : index
    %34 = vector.load %arg4[%c3_21, %c0_22] : memref<7x128xf32, #tpu.memory_space<vmem>>, vector<1x128xf32>
    %35 = vector.shape_cast %34 : vector<1x128xf32> to vector<128xf32>
    %36 = vector.shape_cast %35 : vector<128xf32> to vector<1x128xf32>
    %37 = vector.broadcast %36 : vector<1x128xf32> to vector<128x128xf32>
    %38 = arith.addf %33, %37 : vector<128x128xf32>
    %c0_23 = arith.constant 0 : index
    %c0_24 = arith.constant 0 : index
    %39 = vector.load %arg2[%c0_23, %c0_24] : memref<128x128xf32, #tpu.memory_space<vmem>>, vector<128x128xf32>
    %cst_25 = arith.constant 5.000000e-01 : f32
    %40 = vector.broadcast %cst_25 : f32 to vector<128x128xf32>
    %41 = arith.mulf %40, %38 : vector<128x128xf32>
    %42 = math.exp %41 : vector<128x128xf32>
    %43 = arith.mulf %30, %42 : vector<128x128xf32>
    %44 = arith.addf %39, %43 : vector<128x128xf32>
    %45 = math.exp %38 : vector<128x128xf32>
    %46 = arith.mulf %30, %30 : vector<128x128xf32>
    %47 = arith.addf %45, %46 : vector<128x128xf32>
    %cst_26 = arith.constant 1.000000e+00 : f32
    %48 = vector.broadcast %cst_26 : f32 to vector<128x128xf32>
    %49 = arith.subf %47, %48 : vector<128x128xf32>
    %50 = arith.subf %49, %38 : vector<128x128xf32>
    %cst_27 = arith.constant dense<0.000000e+00> : vector<128xf32>
    %51 = vector.multi_reduction <add>, %50, %cst_27 [1] : vector<128x128xf32> to vector<128xf32>
    %52 = vector.shape_cast %51 : vector<128xf32> to vector<128x1xf32>
    %53 = vector.shape_cast %52 : vector<128x1xf32> to vector<128x1xf32>
    %54 = vector.broadcast %53 : vector<128x1xf32> to vector<128x128xf32>
    %c0_28 = arith.constant 0 : index
    %c0_29 = arith.constant 0 : index
    %55 = vector.load %arg6[%c0_28, %c0_29] : memref<128x128xf32, #tpu.memory_space<vmem>>, vector<128x128xf32>
    tpu.vector_store %arg6[%c0_28, %c0_29], %54 {strides = array<i32>} : memref<128x128xf32, #tpu.memory_space<vmem>>, vector<128x128xf32>,
    %56 = arith.truncf %44 : vector<128x128xf32> to vector<128x128xbf16>
    %c4 = arith.constant 4 : index
    %c0_30 = arith.constant 0 : index
    %c0_31 = arith.constant 0 : index
    %57 = vector.load %arg3[%c4, %c0_30, %c0_31] : memref<7x128x128xbf16, #tpu.memory_space<vmem>>, vector<1x128x128xbf16>
    %58 = vector.shape_cast %57 : vector<1x128x128xbf16> to vector<128x128xbf16>
    %cst_32 = arith.constant dense<0.000000e+00> : vector<128x128xf32>
    %59 = tpu.matmul %56, %58, %cst_32 {dimension_numbers = #tpu.dot_dimension_numbers<[1], [0], [0], [1], [0, 0, 1, 1], [], []>} : vector<128x128xbf16>, vector<128x128xbf16>, vector<128x128xf32> -> vector<128x128xf32>
    %c4_33 = arith.constant 4 : index
    %c0_34 = arith.constant 0 : index
    %60 = vector.load %arg4[%c4_33, %c0_34] : memref<7x128xf32, #tpu.memory_space<vmem>>, vector<1x128xf32>
    %61 = vector.shape_cast %60 : vector<1x128xf32> to vector<128xf32>
    %62 = vector.shape_cast %61 : vector<128xf32> to vector<1x128xf32>
    %63 = vector.broadcast %62 : vector<1x128xf32> to vector<128x128xf32>
    %64 = arith.addf %59, %63 : vector<128x128xf32>
    %cst_35 = arith.constant 0.000000e+00 : f32
    %65 = vector.broadcast %cst_35 : f32 to vector<128x128xf32>
    %66 = arith.maximumf %64, %65 : vector<128x128xf32>
    %67 = arith.truncf %66 : vector<128x128xf32> to vector<128x128xbf16>
    %c5 = arith.constant 5 : index
    %c0_36 = arith.constant 0 : index
    %c0_37 = arith.constant 0 : index
    %68 = vector.load %arg3[%c5, %c0_36, %c0_37] : memref<7x128x128xbf16, #tpu.memory_space<vmem>>, vector<1x128x128xbf16>
    %69 = vector.shape_cast %68 : vector<1x128x128xbf16> to vector<128x128xbf16>
    %cst_38 = arith.constant dense<0.000000e+00> : vector<128x128xf32>
    %70 = tpu.matmul %67, %69, %cst_38 {dimension_numbers = #tpu.dot_dimension_numbers<[1], [0], [0], [1], [0, 0, 1, 1], [], []>} : vector<128x128xbf16>, vector<128x128xbf16>, vector<128x128xf32> -> vector<128x128xf32>
    %c5_39 = arith.constant 5 : index
    %c0_40 = arith.constant 0 : index
    %71 = vector.load %arg4[%c5_39, %c0_40] : memref<7x128xf32, #tpu.memory_space<vmem>>, vector<1x128xf32>
    %72 = vector.shape_cast %71 : vector<1x128xf32> to vector<128xf32>
    %73 = vector.shape_cast %72 : vector<128xf32> to vector<1x128xf32>
    %74 = vector.broadcast %73 : vector<1x128xf32> to vector<128x128xf32>
    %75 = arith.addf %70, %74 : vector<128x128xf32>
    %cst_41 = arith.constant 0.000000e+00 : f32
    %76 = vector.broadcast %cst_41 : f32 to vector<128x128xf32>
    %77 = arith.maximumf %75, %76 : vector<128x128xf32>
    %78 = arith.truncf %77 : vector<128x128xf32> to vector<128x128xbf16>
    %c6 = arith.constant 6 : index
    %c0_42 = arith.constant 0 : index
    %c0_43 = arith.constant 0 : index
    %79 = vector.load %arg3[%c6, %c0_42, %c0_43] : memref<7x128x128xbf16, #tpu.memory_space<vmem>>, vector<1x128x128xbf16>
    %80 = vector.shape_cast %79 : vector<1x128x128xbf16> to vector<128x128xbf16>
    %cst_44 = arith.constant dense<0.000000e+00> : vector<128x128xf32>
    %81 = tpu.matmul %78, %80, %cst_44 {dimension_numbers = #tpu.dot_dimension_numbers<[1], [0], [0], [1], [0, 0, 1, 1], [], []>} : vector<128x128xbf16>, vector<128x128xbf16>, vector<128x128xf32> -> vector<128x128xf32>
    %c6_45 = arith.constant 6 : index
    %c0_46 = arith.constant 0 : index
    %82 = vector.load %arg4[%c6_45, %c0_46] : memref<7x128xf32, #tpu.memory_space<vmem>>, vector<1x128xf32>
    %83 = vector.shape_cast %82 : vector<1x128xf32> to vector<128xf32>
    %84 = vector.shape_cast %83 : vector<128xf32> to vector<1x128xf32>
    %85 = vector.broadcast %84 : vector<1x128xf32> to vector<128x128xf32>
    %86 = arith.addf %81, %85 : vector<128x128xf32>
    %cst_47 = arith.constant 0.000000e+00 : f32
    %87 = vector.broadcast %cst_47 : f32 to vector<128x128xf32>
    %88 = arith.maximumf %86, %87 : vector<128x128xf32>
    %c0_48 = arith.constant 0 : index
    %c0_49 = arith.constant 0 : index
    %89 = vector.load %arg5[%c0_48, %c0_49] : memref<128x128xf32, #tpu.memory_space<vmem>>, vector<128x128xf32>
    tpu.vector_store %arg5[%c0_48, %c0_49], %88 {strides = array<i32>} : memref<128x128xf32, #tpu.memory_space<vmem>>, vector<128x128xf32>,
    return
  }
  func.func @transform_0(%arg0: i32) -> (i32, i32) {
    %c0_i32 = arith.constant 0 : i32
    %c0_i32_0 = arith.constant 0 : i32
    return %arg0, %c0_i32 : i32, i32
  }
  func.func @transform_1(%arg0: i32) -> (i32, i32) {
    %c0_i32 = arith.constant 0 : i32
    %c0_i32_0 = arith.constant 0 : i32
    return %arg0, %c0_i32 : i32, i32
  }
  func.func @transform_2(%arg0: i32) -> (i32, i32, i32) {
    %c0_i32 = arith.constant 0 : i32
    %c0_i32_0 = arith.constant 0 : i32
    %c0_i32_1 = arith.constant 0 : i32
    %c0_i32_2 = arith.constant 0 : i32
    return %c0_i32, %c0_i32_0, %c0_i32_1 : i32, i32, i32
  }
  func.func @transform_3(%arg0: i32) -> (i32, i32) {
    %c0_i32 = arith.constant 0 : i32
    %c0_i32_0 = arith.constant 0 : i32
    %c0_i32_1 = arith.constant 0 : i32
    return %c0_i32, %c0_i32_0 : i32, i32
  }
  func.func @transform_4(%arg0: i32) -> (i32, i32) {
    %c0_i32 = arith.constant 0 : i32
    %c0_i32_0 = arith.constant 0 : i32
    return %arg0, %c0_i32 : i32, i32
  }
  func.func @transform_5(%arg0: i32) -> (i32, i32) {
    %c0_i32 = arith.constant 0 : i32
    %c0_i32_0 = arith.constant 0 : i32
    return %arg0, %c0_i32 : i32, i32
  }
}

</mosaic_0001>

<llo_original>
// kernel: vae_forward.1
$region0: #{vae_forward.1}
  #allocation0 [shape = 'u32[]', space=smem, size = 0x4, offset = 0x4, fixed_abs, tag = 'smem constant byte address 0x4 - core index']
  #allocation1 [shape = 'u32[144,128]{1,0:T(1,128)}', space=vmem, size = 0x12000, scoped, tag = 'internal scratch']
  %s0 = inlined_call_operand.vmem [shape: bf16[256,128], index: 0, kind: input, shape index: {}]
  %s1 = inlined_call_operand.vmem [shape: f32[256,128], index: 1, kind: input, shape index: {}]
  %s2 = inlined_call_operand.vmem [shape: bf16[7,128,128], index: 2, kind: input, shape index: {}]
  %s3 = inlined_call_operand.vmem [shape: f32[7,128], index: 3, kind: input, shape index: {}]
  %s4 = inlined_call_operand.vmem [shape: f32[256,128], index: 4, kind: output, shape index: {0}]
  %s5 = inlined_call_operand.vmem [shape: f32[256,128], index: 5, kind: output, shape index: {1}]
  %6 = xla_tuple %s4, %s5
  %s7 = sld [smem:[#allocation0]]
  $region57: #{vae_forward.1} parent=0
    _
  %s9 = ssub.s32 1, %s7
  %s10 = scalar_select 0, %s9, %s7
  loop: start=0, step=1, limit=4
  $region2: #{vae_forward.1} parent=0 // loop_pre_header
    _
  $region3: #{vae_forward.1} parent=0 // loop_header
    %s12 = sphi 0, %s16
    %p13 = scmp.ge.s32.totalorder %s12, 4
    %s22 = sphi 0, %s24
    %s25 = sphi 0, %s22
    %s26 = sphi 0, %s25
    %s42 = sphi 0, %s26
    %s48 = sphi 0, %s50
    %s51 = sphi 0, %s48
    %s52 = sphi 0, %s51
    %s68 = sphi 0, %s52
    %s72 = sphi 0, %s72
    %s74 = sphi 0, %s72
    %s75 = sphi 0, %s74
    %s89 = sphi 0, %s75
    %s93 = sphi 0, %s93
    %s95 = sphi 0, %s93
    %s96 = sphi 0, %s95
    %s110 = sphi 0, %s96
    %s116 = sphi 0, %s118
    %s119 = sphi 0, %s116
    %s120 = sphi 0, %s119
    %s136 = sphi 0, %s120
    %s142 = sphi 0, %s144
    %s145 = sphi 0, %s142
    %s146 = sphi 0, %s145
    %s162 = sphi 0, %s146
  $region4: #{vae_forward.1} parent=0 // loop_header_branch
    %15 = sbr.rel (%p13) target = $region8
  $region5: #{vae_forward.1} parent=0 // loop_body
    %s17 = ssub.s32 %s12, 1
    %s18 = ssub.s32 %s12, 2
    %s19 = sadd.s32 %s12, 1
    %s20 = ssub.s32 %s12, %s19
    %p21 = scmp.eq.s32.totalorder %s20, 0
    %s23 = sadd.s32 %s22, 1
    %s24 = scalar_select %p21, %s22, %s23
    %p27 = pneg %p21
    %p28 = scmp.eq.s32.totalorder %s12, 1
    %p29 = por %p27, %p28
    %p30 = scmp.ne.s32.totalorder %s22, %s25
    %p31 = scmp.eq.s32.totalorder %s12, 0
    %p32 = por %p30, %p31
    %p33 = scmp.ne.s32.totalorder %s22, %s25
    %p34 = scmp.eq.s32.totalorder %s17, 1
    %p35 = por %p33, %p34
    %p36 = scmp.ne.s32.totalorder %s25, %s26
    %p37 = scmp.eq.s32.totalorder %s17, 0
    %p38 = por %p36, %p37
    %p39 = scmp.ne.s32.totalorder %s25, %s26
    %p40 = scmp.eq.s32.totalorder %s18, 1
    %p41 = por %p39, %p40
    %p43 = scmp.ne.s32.totalorder %s26, %s42
    %p44 = scmp.eq.s32.totalorder %s18, 0
    %p45 = por %p43, %p44
    %s46 = ssub.s32 %s12, %s19
    %p47 = scmp.eq.s32.totalorder %s46, 0
    %s49 = sadd.s32 %s48, 1
    %s50 = scalar_select %p47, %s48, %s49
    %p53 = pneg %p47
    %p54 = scmp.eq.s32.totalorder %s12, 1
    %p55 = por %p53, %p54
    %p56 = scmp.ne.s32.totalorder %s48, %s51
    %p57 = scmp.eq.s32.totalorder %s12, 0
    %p58 = por %p56, %p57
    %p59 = scmp.ne.s32.totalorder %s48, %s51
    %p60 = scmp.eq.s32.totalorder %s17, 1
    %p61 = por %p59, %p60
    %p62 = scmp.ne.s32.totalorder %s51, %s52
    %p63 = scmp.eq.s32.totalorder %s17, 0
    %p64 = por %p62, %p63
    %p65 = scmp.ne.s32.totalorder %s51, %s52
    %p66 = scmp.eq.s32.totalorder %s18, 1
    %p67 = por %p65, %p66
    %p69 = scmp.ne.s32.totalorder %s52, %s68
    %p70 = scmp.eq.s32.totalorder %s18, 0
    %p71 = por %p69, %p70
    %s73 = sadd.s32 %s72, 1
    %p76 = scmp.eq.s32.totalorder %s12, 1
    %p77 = scmp.ne.s32.totalorder %s72, %s74
    %p78 = scmp.eq.s32.totalorder %s12, 0
    %p79 = por %p77, %p78
    %p80 = scmp.ne.s32.totalorder %s72, %s74
    %p81 = scmp.eq.s32.totalorder %s17, 1
    %p82 = por %p80, %p81
    %p83 = scmp.ne.s32.totalorder %s74, %s75
    %p84 = scmp.eq.s32.totalorder %s17, 0
    %p85 = por %p83, %p84
    %p86 = scmp.ne.s32.totalorder %s74, %s75
    %p87 = scmp.eq.s32.totalorder %s18, 1
    %p88 = por %p86, %p87
    %p90 = scmp.ne.s32.totalorder %s75, %s89
    %p91 = scmp.eq.s32.totalorder %s18, 0
    %p92 = por %p90, %p91
    %s94 = sadd.s32 %s93, 1
    %p97 = scmp.eq.s32.totalorder %s12, 1
    %p98 = scmp.ne.s32.totalorder %s93, %s95
    %p99 = scmp.eq.s32.totalorder %s12, 0
    %p100 = por %p98, %p99
    %p101 = scmp.ne.s32.totalorder %s93, %s95
    %p102 = scmp.eq.s32.totalorder %s17, 1
    %p103 = por %p101, %p102
    %p104 = scmp.ne.s32.totalorder %s95, %s96
    %p105 = scmp.eq.s32.totalorder %s17, 0
    %p106 = por %p104, %p105
    %p107 = scmp.ne.s32.totalorder %s95, %s96
    %p108 = scmp.eq.s32.totalorder %s18, 1
    %p109 = por %p107, %p108
    %p111 = scmp.ne.s32.totalorder %s96, %s110
    %p112 = scmp.eq.s32.totalorder %s18, 0
    %p113 = por %p111, %p112
    %s114 = ssub.s32 %s12, %s19
    %p115 = scmp.eq.s32.totalorder %s114, 0
    %s117 = sadd.s32 %s116, 1
    %s118 = scalar_select %p115, %s116, %s117
    %p121 = pneg %p115
    %p122 = scmp.eq.s32.totalorder %s12, 1
    %p123 = por %p121, %p122
    %p124 = scmp.ne.s32.totalorder %s116, %s119
    %p125 = scmp.eq.s32.totalorder %s12, 0
    %p126 = por %p124, %p125
    %p127 = scmp.ne.s32.totalorder %s116, %s119
    %p128 = scmp.eq.s32.totalorder %s17, 1
    %p129 = por %p127, %p128
    %p130 = scmp.ne.s32.totalorder %s119, %s120
    %p131 = scmp.eq.s32.totalorder %s17, 0
    %p132 = por %p130, %p131
    %p133 = scmp.ne.s32.totalorder %s119, %s120
    %p134 = scmp.eq.s32.totalorder %s18, 1
    %p135 = por %p133, %p134
    %p137 = scmp.ne.s32.totalorder %s120, %s136
    %p138 = scmp.eq.s32.totalorder %s18, 0
    %p139 = por %p137, %p138
    %s140 = ssub.s32 %s12, %s19
    %p141 = scmp.eq.s32.totalorder %s140, 0
    %s143 = sadd.s32 %s142, 1
    %s144 = scalar_select %p141, %s142, %s143
    %p147 = pneg %p141
    %p148 = scmp.eq.s32.totalorder %s12, 1
    %p149 = por %p147, %p148
    %p150 = scmp.ne.s32.totalorder %s142, %s145
    %p151 = scmp.eq.s32.totalorder %s12, 0
    %p152 = por %p150, %p151
    %p153 = scmp.ne.s32.totalorder %s142, %s145
    %p154 = scmp.eq.s32.totalorder %s17, 1
    %p155 = por %p153, %p154
    %p156 = scmp.ne.s32.totalorder %s145, %s146
    %p157 = scmp.eq.s32.totalorder %s17, 0
    %p158 = por %p156, %p157
    %p159 = scmp.ne.s32.totalorder %s145, %s146
    %p160 = scmp.eq.s32.totalorder %s18, 1
    %p161 = por %p159, %p160
    %p163 = scmp.ne.s32.totalorder %s146, %s162
    %p164 = scmp.eq.s32.totalorder %s18, 0
    %p165 = por %p163, %p164
    %p166 = scmp.le.s32.totalorder 1, %s12
    %p167 = scmp.lt.s32.totalorder %s12, 3
    %p168 = pnand %p166, %p167
    %p169 = pneg %p168
    // Predicated region
    $region9: #{vae_forward.1} parent=5 // pred_check
      _
    $region10: #{vae_forward.1} parent=5 // pred_check_branch
      %171 = sbr.rel (%p168) target = $region12
    $region11: #{vae_forward.1} parent=5 // pred_region
      %s172 = ssub.s32 %s12, 1
      // Predicated region
      $region13: #{vae_forward.1} parent=11 // pred_check
        %p173 = pneg %p85
      $region14: #{vae_forward.1} parent=11 // pred_check_branch
        %175 = sbr.rel (%p173) target = $region16
      $region15: #{vae_forward.1} parent=11 // pred_region
        _
      $region16: #{vae_forward.1} parent=11 // pred_fallthru
        _
      // Predicated region
      $region17: #{vae_forward.1} parent=11 // pred_check
        %p176 = pneg %p106
      $region18: #{vae_forward.1} parent=11 // pred_check_branch
        %178 = sbr.rel (%p176) target = $region20
      $region19: #{vae_forward.1} parent=11 // pred_region
        _
      $region20: #{vae_forward.1} parent=11 // pred_fallthru
        _
    $region12: #{vae_forward.1} parent=5 // pred_fallthru
      _
    %p179 = scmp.lt.s32.totalorder %s12, 2
    // Predicated region
    $region21: #{vae_forward.1} parent=5 // pred_check
      %p180 = pneg %p179
    $region22: #{vae_forward.1} parent=5 // pred_check_branch
      %182 = sbr.rel (%p180) target = $region24
    $region23: #{vae_forward.1} parent=5 // pred_region
      // Predicated region
      $region25: #{vae_forward.1} parent=23 // pred_check
        %p183 = pneg %p32
      $region26: #{vae_forward.1} parent=23 // pred_check_branch
        %185 = sbr.rel (%p183) target = $region28
      $region27: #{vae_forward.1} parent=23 // pred_region
        %s186 = smul.u32 16, %s12
        %p187 = scmp.lt.s32.totalorder %s186, 31
        %s188 = scalar_select %p187, %s186, 31
        %s189 = smul.addr %s188, 4
        %s190 = scalar_lea.vmem %s0, %s189
        %s191 = smul.u32 16, %s12
      $region28: #{vae_forward.1} parent=23 // pred_fallthru
        _
      // Predicated region
      $region29: #{vae_forward.1} parent=23 // pred_check
        %p192 = pneg %p58
      $region30: #{vae_forward.1} parent=23 // pred_check_branch
        %194 = sbr.rel (%p192) target = $region32
      $region31: #{vae_forward.1} parent=23 // pred_region
        %s195 = smul.u32 16, %s12
        %p196 = scmp.lt.s32.totalorder %s195, 31
        %s197 = scalar_select %p196, %s195, 31
        %s198 = smul.addr %s197, 8
        %s199 = scalar_lea.vmem %s1, %s198
        %s200 = smul.u32 16, %s12
      $region32: #{vae_forward.1} parent=23 // pred_fallthru
        _
    $region24: #{vae_forward.1} parent=5 // pred_fallthru
      _
    %p201 = scmp.le.s32.totalorder 1, %s12
    %p202 = scmp.lt.s32.totalorder %s12, 3
    %p203 = pnand %p201, %p202
    %p204 = pneg %p203
    // Predicated region
    $region33: #{vae_forward.1} parent=5 // pred_check
      _
    $region34: #{vae_forward.1} parent=5 // pred_check_branch
      %206 = sbr.rel (%p203) target = $region36
    $region35: #{vae_forward.1} parent=5 // pred_region
      %s207 = ssub.s32 %s12, 1
      %s208 = smul.u32 16, %s17
      %p209 = scmp.lt.s32.totalorder %s208, 31
      %s210 = scalar_select %p209, %s208, 31
      %s211 = smul.addr %s210, 4
      %s212 = scalar_lea.vmem %s0, %s211
      %p213 = pneg %p38
      %p214 = pneg %p35
      %s215 = smul.u32 16, %s17
      %p216 = scmp.lt.s32.totalorder %s215, 31
      %s217 = scalar_select %p216, %s215, 31
      %s218 = smul.addr %s217, 8
      %s219 = scalar_lea.vmem %s1, %s218
      %p220 = pneg %p64
      %p221 = pneg %p61
      %p222 = pneg %p85
      %p223 = pneg %p82
      %p224 = pneg %p106
      %p225 = pneg %p103
      %p226 = pneg %p132
      %p227 = pneg %p129
      %s228 = smul.u32 16, %s17
      %p229 = scmp.lt.s32.totalorder %s228, 31
      %s230 = scalar_select %p229, %s228, 31
      %s231 = smul.addr %s230, 8
      %s232 = scalar_lea.vmem %s4, %s231
      %p233 = pneg %p158
      %p234 = pneg %p155
      %s235 = smul.u32 16, %s17
      %p236 = scmp.lt.s32.totalorder %s235, 31
      %s237 = scalar_select %p236, %s235, 31
      %s238 = smul.addr %s237, 8
      %s239 = scalar_lea.vmem %s5, %s238
      %s240 = smul.u32 16, %s17
      %p241 = scmp.lt.s32.totalorder %s240, 31
      %s242 = scalar_select %p241, %s240, 31
      %s243 = smul.addr %s242, 4
      %s244 = scalar_lea.vmem %s0, %s243
      %s245 = smul.u32 16, %s17
      %s246 = smul.u32 16, %s17
      %p247 = scmp.lt.s32.totalorder %s246, 31
      %s248 = scalar_select %p247, %s246, 31
      %s249 = smul.addr %s248, 8
      %s250 = scalar_lea.vmem %s1, %s249
      %s251 = smul.u32 16, %s17
      %s252 = smul.u32 16, %s17
      %p253 = scmp.lt.s32.totalorder %s252, 31
      %s254 = scalar_select %p253, %s252, 31
      %s255 = smul.addr %s254, 8
      %s256 = scalar_lea.vmem %s4, %s255
      %s257 = smul.u32 16, %s17
      %s258 = smul.u32 16, %s17
      %p259 = scmp.lt.s32.totalorder %s258, 31
      %s260 = scalar_select %p259, %s258, 31
      %s261 = smul.addr %s260, 8
      %s262 = scalar_lea.vmem %s5, %s261
      %s263 = smul.u32 16, %s17
      %v265 = vld [vmem:[%s244] sm:$0xf]
      %v266 = vld [vmem:[%s244 + $0x4] sm:$0xf]
      %v267 = vld [vmem:[%s244 + $0x8] sm:$0xf]
      %v268 = vld [vmem:[%s244 + $0xc] sm:$0xf]
      %v269 = vld [vmem:[%s244 + $0x10] sm:$0xf]
      %v270 = vld [vmem:[%s244 + $0x14] sm:$0xf]
      %v271 = vld [vmem:[%s244 + $0x18] sm:$0xf]
      %v272 = vld [vmem:[%s244 + $0x1c] sm:$0xf]
      %v273 = vld [vmem:[%s244 + $0x20] sm:$0xf]
      %v274 = vld [vmem:[%s244 + $0x24] sm:$0xf]
      %v275 = vld [vmem:[%s244 + $0x28] sm:$0xf]
      %v276 = vld [vmem:[%s244 + $0x2c] sm:$0xf]
      %v277 = vld [vmem:[%s244 + $0x30] sm:$0xf]
      %v278 = vld [vmem:[%s244 + $0x34] sm:$0xf]
      %v279 = vld [vmem:[%s244 + $0x38] sm:$0xf]
      %v280 = vld [vmem:[%s244 + $0x3c] sm:$0xf]
      %v281 = vld [vmem:[%s2] sm:$0xf]
      %v282 = vld [vmem:[%s2 + $0x4] sm:$0xf]
      %v283 = vld [vmem:[%s2 + $0x8] sm:$0xf]
      %v284 = vld [vmem:[%s2 + $0xc] sm:$0xf]
      %v285 = vld [vmem:[%s2 + $0x10] sm:$0xf]
      %v286 = vld [vmem:[%s2 + $0x14] sm:$0xf]
      %v287 = vld [vmem:[%s2 + $0x18] sm:$0xf]
      %v288 = vld [vmem:[%s2 + $0x1c] sm:$0xf]
      %v289 = vld [vmem:[%s2 + $0x20] sm:$0xf]
      %v290 = vld [vmem:[%s2 + $0x24] sm:$0xf]
      %v291 = vld [vmem:[%s2 + $0x28] sm:$0xf]
      %v292 = vld [vmem:[%s2 + $0x2c] sm:$0xf]
      %v293 = vld [vmem:[%s2 + $0x30] sm:$0xf]
      %v294 = vld [vmem:[%s2 + $0x34] sm:$0xf]
      %v295 = vld [vmem:[%s2 + $0x38] sm:$0xf]
      %v296 = vld [vmem:[%s2 + $0x3c] sm:$0xf]
      %v297 = vld [vmem:[%s3] sm:$0x1]
      %v298 = vlaneseq
      %v299 = vshrl.u32 %v298, 7
      %v300 = vsub.s32 0, %v299
      %v301 = vrot.slane %v297, %v300
      %v318 = vunpack.c.l.b16 %v265
      %v319 = vunpack.c.l.b16 %v266
      %v320 = vunpack.c.l.b16 %v267
      %v321 = vunpack.c.l.b16 %v268
      %v322 = vunpack.c.l.b16 %v269
      %v323 = vunpack.c.l.b16 %v270
      %v324 = vunpack.c.l.b16 %v271
      %v325 = vunpack.c.l.b16 %v272
      %v326 = vunpack.c.l.b16 %v273
      %v327 = vunpack.c.l.b16 %v274
      %v328 = vunpack.c.l.b16 %v275
      %v329 = vunpack.c.l.b16 %v276
      %v330 = vunpack.c.l.b16 %v277
      %v331 = vunpack.c.l.b16 %v278
      %v332 = vunpack.c.l.b16 %v279
      %v333 = vunpack.c.l.b16 %v280
      %v334 = vpack.c.b16 %v319, %v318
      %v335 = vpack.c.b16 %v321, %v320
      %v336 = vpack.c.b16 %v323, %v322
      %v337 = vpack.c.b16 %v325, %v324
      %v338 = vpack.c.b16 %v327, %v326
      %v339 = vpack.c.b16 %v329, %v328
      %v340 = vpack.c.b16 %v331, %v330
      %v341 = vpack.c.b16 %v333, %v332
      %v366 = vunpack.c.l.b16 %v281
      %v367 = vunpack.c.l.b16 %v282
      %v368 = vunpack.c.l.b16 %v283
      %v369 = vunpack.c.l.b16 %v284
      %v370 = vunpack.c.l.b16 %v285
      %v371 = vunpack.c.l.b16 %v286
      %v372 = vunpack.c.l.b16 %v287
      %v373 = vunpack.c.l.b16 %v288
      %v374 = vunpack.c.l.b16 %v289
      %v375 = vunpack.c.l.b16 %v290
      %v376 = vunpack.c.l.b16 %v291
      %v377 = vunpack.c.l.b16 %v292
      %v378 = vunpack.c.l.b16 %v293
      %v379 = vunpack.c.l.b16 %v294
      %v380 = vunpack.c.l.b16 %v295
      %v381 = vunpack.c.l.b16 %v296
      %v382 = vpack.c.b16 %v367, %v366
      %v383 = vpack.c.b16 %v369, %v368
      %v384 = vpack.c.b16 %v371, %v370
      %v385 = vpack.c.b16 %v373, %v372
      %v386 = vpack.c.b16 %v375, %v374
      %v387 = vpack.c.b16 %v377, %v376
      %v388 = vpack.c.b16 %v379, %v378
      %v389 = vpack.c.b16 %v381, %v380
      %398 = vmatprep.subr.bf16.mxu0 0
      %399 = vmatpush1.bf16.msra.mxu0 %v382
      %400 = vmatprep.subr.bf16.mxu0 0
      %401 = vmatpush1.bf16.msra.mxu0 %v383
      %402 = vmatprep.subr.bf16.mxu0 0
      %403 = vmatpush1.bf16.msra.mxu0 %v384
      %404 = vmatprep.subr.bf16.mxu0 0
      %405 = vmatpush1.bf16.msra.mxu0 %v385
      %406 = vmatprep.subr.bf16.mxu0 0
      %407 = vmatpush1.bf16.msra.mxu0 %v386
      %408 = vmatprep.subr.bf16.mxu0 0
      %409 = vmatpush1.bf16.msra.mxu0 %v387
      %410 = vmatprep.subr.bf16.mxu0 0
      %411 = vmatpush1.bf16.msra.mxu0 %v388
      %412 = vmatprep.subr.bf16.mxu0 0
      %413 = vmatpush1.bf16.msra.mxu0 %v389
      %414 = vmatprep.subr.bf16.mxu0 0
      %415 = vmatpush1.bf16.msra.mxu0 0
      %416 = vmatprep.subr.bf16.mxu0 0
      %417 = vmatpush1.bf16.msra.mxu0 0
      %418 = vmatprep.subr.bf16.mxu0 0
      %419 = vmatpush1.bf16.msra.mxu0 0
      %420 = vmatprep.subr.bf16.mxu0 0
      %421 = vmatpush1.bf16.msra.mxu0 0
      %422 = vmatprep.subr.bf16.mxu0 0
      %423 = vmatpush1.bf16.msra.mxu0 0
      %424 = vmatprep.subr.bf16.mxu0 0
      %425 = vmatpush1.bf16.msra.mxu0 0
      %426 = vmatprep.subr.bf16.mxu0 0
      %427 = vmatpush1.bf16.msra.mxu0 0
      %428 = vmatprep.subr.bf16.mxu0 0
      %429 = vmatpush1.bf16.msra.mxu0 0
      %430 = vmatprep.mubr.bf16.mxu0 0
      %431 = vmatmul.mubr.bf16.gmra.mrb[0].mxu0 %v334
      %v432 = vpop.f32.mrb[0].mxu0
      %v433 = vadd.f32 %v301, %v432
      %v434 = vpop.f32.mrb[0].mxu0
      %v435 = vpop.f32.mrb[0].mxu0
      %v436 = vadd.f32 %v301, %v435
      %v437 = vpop.f32.mrb[0].mxu0
      %438 = vmatprep.mubr.bf16.mxu0 0
      %439 = vmatmul.mubr.bf16.gmra.mrb[0].mxu0 %v335
      %v440 = vpop.f32.mrb[0].mxu0
      %v441 = vadd.f32 %v301, %v440
      %v442 = vpop.f32.mrb[0].mxu0
      %v443 = vpop.f32.mrb[0].mxu0
      %v444 = vadd.f32 %v301, %v443
      %v445 = vpop.f32.mrb[0].mxu0
      %446 = vmatprep.mubr.bf16.mxu0 0
      %447 = vmatmul.mubr.bf16.gmra.mrb[0].mxu0 %v336
      %v448 = vpop.f32.mrb[0].mxu0
      %v449 = vadd.f32 %v301, %v448
      %v450 = vpop.f32.mrb[0].mxu0
      %v451 = vpop.f32.mrb[0].mxu0
      %v452 = vadd.f32 %v301, %v451
      %v453 = vpop.f32.mrb[0].mxu0
      %454 = vmatprep.mubr.bf16.mxu0 0
      %455 = vmatmul.mubr.bf16.gmra.mrb[0].mxu0 %v337
      %v456 = vpop.f32.mrb[0].mxu0
      %v457 = vadd.f32 %v301, %v456
      %v458 = vpop.f32.mrb[0].mxu0
      %v459 = vpop.f32.mrb[0].mxu0
      %v460 = vadd.f32 %v301, %v459
      %v461 = vpop.f32.mrb[0].mxu0
      %462 = vmatprep.mubr.bf16.mxu0 0
      %463 = vmatmul.mubr.bf16.gmra.mrb[0].mxu0 %v338
      %v464 = vpop.f32.mrb[0].mxu0
      %v465 = vadd.f32 %v301, %v464
      %v466 = vpop.f32.mrb[0].mxu0
      %v467 = vpop.f32.mrb[0].mxu0
      %v468 = vadd.f32 %v301, %v467
      %v469 = vpop.f32.mrb[0].mxu0
      %470 = vmatprep.mubr.bf16.mxu0 0
      %471 = vmatmul.mubr.bf16.gmra.mrb[0].mxu0 %v339
      %v472 = vpop.f32.mrb[0].mxu0
      %v473 = vadd.f32 %v301, %v472
      %v474 = vpop.f32.mrb[0].mxu0
      %v475 = vpop.f32.mrb[0].mxu0
      %v476 = vadd.f32 %v301, %v475
      %v477 = vpop.f32.mrb[0].mxu0
      %478 = vmatprep.mubr.bf16.mxu0 0
      %479 = vmatmul.mubr.bf16.gmra.mrb[0].mxu0 %v340
      %v480 = vpop.f32.mrb[0].mxu0
      %v481 = vadd.f32 %v301, %v480
      %v482 = vpop.f32.mrb[0].mxu0
      %v483 = vpop.f32.mrb[0].mxu0
      %v484 = vadd.f32 %v301, %v483
      %v485 = vpop.f32.mrb[0].mxu0
      %486 = vmatprep.mubr.bf16.mxu0 0
      %487 = vmatmul.mubr.bf16.gmra.mrb[0].mxu0 %v341
      %v488 = vpop.f32.mrb[0].mxu0
      %v489 = vadd.f32 %v301, %v488
      %v490 = vpop.f32.mrb[0].mxu0
      %v491 = vpop.f32.mrb[0].mxu0
      %v492 = vadd.f32 %v301, %v491
      %v493 = vpop.f32.mrb[0].mxu0
      %494 = vdwg.mxu0
      %v495 = vmax.f32 %v433, 0.0
      %v496 = vmax.f32 %v436, 0.0
      %v497 = vmax.f32 %v441, 0.0
      %v498 = vmax.f32 %v444, 0.0
      %v499 = vmax.f32 %v449, 0.0
      %v500 = vmax.f32 %v452, 0.0
      %v501 = vmax.f32 %v457, 0.0
      %v502 = vmax.f32 %v460, 0.0
      %v503 = vmax.f32 %v465, 0.0
      %v504 = vmax.f32 %v468, 0.0
      %v505 = vmax.f32 %v473, 0.0
      %v506 = vmax.f32 %v476, 0.0
      %v507 = vmax.f32 %v481, 0.0
      %v508 = vmax.f32 %v484, 0.0
      %v509 = vmax.f32 %v489, 0.0
      %v510 = vmax.f32 %v492, 0.0
      %v511 = vpack.c.bf16 %v496, %v495
      %v512 = vpack.c.bf16 %v498, %v497
      %v513 = vpack.c.bf16 %v500, %v499
      %v514 = vpack.c.bf16 %v502, %v501
      %v515 = vpack.c.bf16 %v504, %v503
      %v516 = vpack.c.bf16 %v506, %v505
      %v517 = vpack.c.bf16 %v508, %v507
      %v518 = vpack.c.bf16 %v510, %v509
      %s519 = scalar_lea.vmem %s2, 64
      %v520 = vld [vmem:[%s519] sm:$0xf]
      %v521 = vld [vmem:[%s519 + $0x4] sm:$0xf]
      %v522 = vld [vmem:[%s519 + $0x8] sm:$0xf]
      %v523 = vld [vmem:[%s519 + $0xc] sm:$0xf]
      %v524 = vld [vmem:[%s519 + $0x10] sm:$0xf]
      %v525 = vld [vmem:[%s519 + $0x14] sm:$0xf]
      %v526 = vld [vmem:[%s519 + $0x18] sm:$0xf]
      %v527 = vld [vmem:[%s519 + $0x1c] sm:$0xf]
      %v528 = vld [vmem:[%s519 + $0x20] sm:$0xf]
      %v529 = vld [vmem:[%s519 + $0x24] sm:$0xf]
      %v530 = vld [vmem:[%s519 + $0x28] sm:$0xf]
      %v531 = vld [vmem:[%s519 + $0x2c] sm:$0xf]
      %v532 = vld [vmem:[%s519 + $0x30] sm:$0xf]
      %v533 = vld [vmem:[%s519 + $0x34] sm:$0xf]
      %v534 = vld [vmem:[%s519 + $0x38] sm:$0xf]
      %v535 = vld [vmem:[%s519 + $0x3c] sm:$0xf]
      %v536 = vld [vmem:[%s3 + $0x1] sm:$0x1]
      %v537 = vlaneseq
      %v538 = vshrl.u32 %v537, 7
      %v539 = vsub.s32 0, %v538
      %v540 = vrot.slane %v536, %v539
      %v557 = vunpack.c.l.b16 %v520
      %v558 = vunpack.c.l.b16 %v521
      %v559 = vunpack.c.l.b16 %v522
      %v560 = vunpack.c.l.b16 %v523
      %v561 = vunpack.c.l.b16 %v524
      %v562 = vunpack.c.l.b16 %v525
      %v563 = vunpack.c.l.b16 %v526
      %v564 = vunpack.c.l.b16 %v527
      %v565 = vunpack.c.l.b16 %v528
      %v566 = vunpack.c.l.b16 %v529
      %v567 = vunpack.c.l.b16 %v530
      %v568 = vunpack.c.l.b16 %v531
      %v569 = vunpack.c.l.b16 %v532
      %v570 = vunpack.c.l.b16 %v533
      %v571 = vunpack.c.l.b16 %v534
      %v572 = vunpack.c.l.b16 %v535
      %v573 = vpack.c.b16 %v558, %v557
      %v574 = vpack.c.b16 %v560, %v559
      %v575 = vpack.c.b16 %v562, %v561
      %v576 = vpack.c.b16 %v564, %v563
      %v577 = vpack.c.b16 %v566, %v565
      %v578 = vpack.c.b16 %v568, %v567
      %v579 = vpack.c.b16 %v570, %v569
      %v580 = vpack.c.b16 %v572, %v571
      %589 = vmatprep.subr.bf16.mxu0 0
      %590 = vmatpush1.bf16.msra.mxu0 %v573
      %591 = vmatprep.subr.bf16.mxu0 0
      %592 = vmatpush1.bf16.msra.mxu0 %v574
      %593 = vmatprep.subr.bf16.mxu0 0
      %594 = vmatpush1.bf16.msra.mxu0 %v575
      %595 = vmatprep.subr.bf16.mxu0 0
      %596 = vmatpush1.bf16.msra.mxu0 %v576
      %597 = vmatprep.subr.bf16.mxu0 0
      %598 = vmatpush1.bf16.msra.mxu0 %v577
      %599 = vmatprep.subr.bf16.mxu0 0
      %600 = vmatpush1.bf16.msra.mxu0 %v578
      %601 = vmatprep.subr.bf16.mxu0 0
      %602 = vmatpush1.bf16.msra.mxu0 %v579
      %603 = vmatprep.subr.bf16.mxu0 0
      %604 = vmatpush1.bf16.msra.mxu0 %v580
      %605 = vmatprep.subr.bf16.mxu0 0
      %606 = vmatpush1.bf16.msra.mxu0 0
      %607 = vmatprep.subr.bf16.mxu0 0
      %608 = vmatpush1.bf16.msra.mxu0 0
      %609 = vmatprep.subr.bf16.mxu0 0
      %610 = vmatpush1.bf16.msra.mxu0 0
      %611 = vmatprep.subr.bf16.mxu0 0
      %612 = vmatpush1.bf16.msra.mxu0 0
      %613 = vmatprep.subr.bf16.mxu0 0
      %614 = vmatpush1.bf16.msra.mxu0 0
      %615 = vmatprep.subr.bf16.mxu0 0
      %616 = vmatpush1.bf16.msra.mxu0 0
      %617 = vmatprep.subr.bf16.mxu0 0
      %618 = vmatpush1.bf16.msra.mxu0 0
      %619 = vmatprep.subr.bf16.mxu0 0
      %620 = vmatpush1.bf16.msra.mxu0 0
      %621 = vmatprep.mubr.bf16.mxu0 0
      %622 = vmatmul.mubr.bf16.gmra.mrb[0].mxu0 %v511
      %v623 = vpop.f32.mrb[0].mxu0
      %v624 = vadd.f32 %v540, %v623
      %v625 = vpop.f32.mrb[0].mxu0
      %v626 = vpop.f32.mrb[0].mxu0
      %v627 = vadd.f32 %v540, %v626
      %v628 = vpop.f32.mrb[0].mxu0
      %629 = vmatprep.mubr.bf16.mxu0 0
      %630 = vmatmul.mubr.bf16.gmra.mrb[0].mxu0 %v512
      %v631 = vpop.f32.mrb[0].mxu0
      %v632 = vadd.f32 %v540, %v631
      %v633 = vpop.f32.mrb[0].mxu0
      %v634 = vpop.f32.mrb[0].mxu0
      %v635 = vadd.f32 %v540, %v634
      %v636 = vpop.f32.mrb[0].mxu0
      %637 = vmatprep.mubr.bf16.mxu0 0
      %638 = vmatmul.mubr.bf16.gmra.mrb[0].mxu0 %v513
      %v639 = vpop.f32.mrb[0].mxu0
      %v640 = vadd.f32 %v540, %v639
      %v641 = vpop.f32.mrb[0].mxu0
      %v642 = vpop.f32.mrb[0].mxu0
      %v643 = vadd.f32 %v540, %v642
      %v644 = vpop.f32.mrb[0].mxu0
      %645 = vmatprep.mubr.bf16.mxu0 0
      %646 = vmatmul.mubr.bf16.gmra.mrb[0].mxu0 %v514
      %v647 = vpop.f32.mrb[0].mxu0
      %v648 = vadd.f32 %v540, %v647
      %v649 = vpop.f32.mrb[0].mxu0
      %v650 = vpop.f32.mrb[0].mxu0
      %v651 = vadd.f32 %v540, %v650
      %v652 = vpop.f32.mrb[0].mxu0
      %653 = vmatprep.mubr.bf16.mxu0 0
      %654 = vmatmul.mubr.bf16.gmra.mrb[0].mxu0 %v515
      %v655 = vpop.f32.mrb[0].mxu0
      %v656 = vadd.f32 %v540, %v655
      %v657 = vpop.f32.mrb[0].mxu0
      %v658 = vpop.f32.mrb[0].mxu0
      %v659 = vadd.f32 %v540, %v658
      %v660 = vpop.f32.mrb[0].mxu0
      %661 = vmatprep.mubr.bf16.mxu0 0
      %662 = vmatmul.mubr.bf16.gmra.mrb[0].mxu0 %v516
      %v663 = vpop.f32.mrb[0].mxu0
      %v664 = vadd.f32 %v540, %v663
      %v665 = vpop.f32.mrb[0].mxu0
      %v666 = vpop.f32.mrb[0].mxu0
      %v667 = vadd.f32 %v540, %v666
      %v668 = vpop.f32.mrb[0].mxu0
      %669 = vmatprep.mubr.bf16.mxu0 0
      %670 = vmatmul.mubr.bf16.gmra.mrb[0].mxu0 %v517
      %v671 = vpop.f32.mrb[0].mxu0
      %v672 = vadd.f32 %v540, %v671
      %v673 = vpop.f32.mrb[0].mxu0
      %v674 = vpop.f32.mrb[0].mxu0
      %v675 = vadd.f32 %v540, %v674
      %v676 = vpop.f32.mrb[0].mxu0
      %677 = vmatprep.mubr.bf16.mxu0 0
      %678 = vmatmul.mubr.bf16.gmra.mrb[0].mxu0 %v518
      %v679 = vpop.f32.mrb[0].mxu0
      %v680 = vadd.f32 %v540, %v679
      %v681 = vpop.f32.mrb[0].mxu0
      %v682 = vpop.f32.mrb[0].mxu0
      %v683 = vadd.f32 %v540, %v682
      %v684 = vpop.f32.mrb[0].mxu0
      %685 = vdwg.mxu0
      %v686 = vmax.f32 %v624, 0.0
      %v687 = vmax.f32 %v627, 0.0
      %v688 = vmax.f32 %v632, 0.0
      %v689 = vmax.f32 %v635, 0.0
      %v690 = vmax.f32 %v640, 0.0
      %v691 = vmax.f32 %v643, 0.0
      %v692 = vmax.f32 %v648, 0.0
      %v693 = vmax.f32 %v651, 0.0
      %v694 = vmax.f32 %v656, 0.0
      %v695 = vmax.f32 %v659, 0.0
      %v696 = vmax.f32 %v664, 0.0
      %v697 = vmax.f32 %v667, 0.0
      %v698 = vmax.f32 %v672, 0.0
      %v699 = vmax.f32 %v675, 0.0
      %v700 = vmax.f32 %v680, 0.0
      %v701 = vmax.f32 %v683, 0.0
      %v702 = vpack.c.bf16 %v687, %v686
      %v703 = vpack.c.bf16 %v689, %v688
      %v704 = vpack.c.bf16 %v691, %v690
      %v705 = vpack.c.bf16 %v693, %v692
      %v706 = vpack.c.bf16 %v695, %v694
      %v707 = vpack.c.bf16 %v697, %v696
      %v708 = vpack.c.bf16 %v699, %v698
      %v709 = vpack.c.bf16 %v701, %v700
      %s710 = scalar_lea.vmem %s2, 128
      %v711 = vld [vmem:[%s710] sm:$0xf]
      %v712 = vld [vmem:[%s710 + $0x4] sm:$0xf]
      %v713 = vld [vmem:[%s710 + $0x8] sm:$0xf]
      %v714 = vld [vmem:[%s710 + $0xc] sm:$0xf]
      %v715 = vld [vmem:[%s710 + $0x10] sm:$0xf]
      %v716 = vld [vmem:[%s710 + $0x14] sm:$0xf]
      %v717 = vld [vmem:[%s710 + $0x18] sm:$0xf]
      %v718 = vld [vmem:[%s710 + $0x1c] sm:$0xf]
      %v719 = vld [vmem:[%s710 + $0x20] sm:$0xf]
      %v720 = vld [vmem:[%s710 + $0x24] sm:$0xf]
      %v721 = vld [vmem:[%s710 + $0x28] sm:$0xf]
      %v722 = vld [vmem:[%s710 + $0x2c] sm:$0xf]
      %v723 = vld [vmem:[%s710 + $0x30] sm:$0xf]
      %v724 = vld [vmem:[%s710 + $0x34] sm:$0xf]
      %v725 = vld [vmem:[%s710 + $0x38] sm:$0xf]
      %v726 = vld [vmem:[%s710 + $0x3c] sm:$0xf]
      %v727 = vld [vmem:[%s3 + $0x2] sm:$0x1]
      %v728 = vlaneseq
      %v729 = vshrl.u32 %v728, 7
      %v730 = vsub.s32 0, %v729
      %v731 = vrot.slane %v727, %v730
      %v748 = vunpack.c.l.b16 %v711
      %v749 = vunpack.c.l.b16 %v712
      %v750 = vunpack.c.l.b16 %v713
      %v751 = vunpack.c.l.b16 %v714
      %v752 = vunpack.c.l.b16 %v715
      %v753 = vunpack.c.l.b16 %v716
      %v754 = vunpack.c.l.b16 %v717
      %v755 = vunpack.c.l.b16 %v718
      %v756 = vunpack.c.l.b16 %v719
      %v757 = vunpack.c.l.b16 %v720
      %v758 = vunpack.c.l.b16 %v721
      %v759 = vunpack.c.l.b16 %v722
      %v760 = vunpack.c.l.b16 %v723
      %v761 = vunpack.c.l.b16 %v724
      %v762 = vunpack.c.l.b16 %v725
      %v763 = vunpack.c.l.b16 %v726
      %v764 = vpack.c.b16 %v749, %v748
      %v765 = vpack.c.b16 %v751, %v750
      %v766 = vpack.c.b16 %v753, %v752
      %v767 = vpack.c.b16 %v755, %v754
      %v768 = vpack.c.b16 %v757, %v756
      %v769 = vpack.c.b16 %v759, %v758
      %v770 = vpack.c.b16 %v761, %v760
      %v771 = vpack.c.b16 %v763, %v762
      %780 = vmatprep.subr.bf16.mxu0 0
      %781 = vmatpush1.bf16.msra.mxu0 %v764
      %782 = vmatprep.subr.bf16.mxu0 0
      %783 = vmatpush1.bf16.msra.mxu0 %v765
      %784 = vmatprep.subr.bf16.mxu0 0
      %785 = vmatpush1.bf16.msra.mxu0 %v766
      %786 = vmatprep.subr.bf16.mxu0 0
      %787 = vmatpush1.bf16.msra.mxu0 %v767
      %788 = vmatprep.subr.bf16.mxu0 0
      %789 = vmatpush1.bf16.msra.mxu0 %v768
      %790 = vmatprep.subr.bf16.mxu0 0
      %791 = vmatpush1.bf16.msra.mxu0 %v769
      %792 = vmatprep.subr.bf16.mxu0 0
      %793 = vmatpush1.bf16.msra.mxu0 %v770
      %794 = vmatprep.subr.bf16.mxu0 0
      %795 = vmatpush1.bf16.msra.mxu0 %v771
      %796 = vmatprep.subr.bf16.mxu0 0
      %797 = vmatpush1.bf16.msra.mxu0 0
      %798 = vmatprep.subr.bf16.mxu0 0
      %799 = vmatpush1.bf16.msra.mxu0 0
      %800 = vmatprep.subr.bf16.mxu0 0
      %801 = vmatpush1.bf16.msra.mxu0 0
      %802 = vmatprep.subr.bf16.mxu0 0
      %803 = vmatpush1.bf16.msra.mxu0 0
      %804 = vmatprep.subr.bf16.mxu0 0
      %805 = vmatpush1.bf16.msra.mxu0 0
      %806 = vmatprep.subr.bf16.mxu0 0
      %807 = vmatpush1.bf16.msra.mxu0 0
      %808 = vmatprep.subr.bf16.mxu0 0
      %809 = vmatpush1.bf16.msra.mxu0 0
      %810 = vmatprep.subr.bf16.mxu0 0
      %811 = vmatpush1.bf16.msra.mxu0 0
      %812 = vmatprep.mubr.bf16.mxu0 0
      %813 = vmatmul.mubr.bf16.gmra.mrb[0].mxu0 %v702
      %v814 = vpop.f32.mrb[0].mxu0
      %v815 = vadd.f32 %v731, %v814
      %v816 = vpop.f32.mrb[0].mxu0
      %v817 = vpop.f32.mrb[0].mxu0
      %v818 = vadd.f32 %v731, %v817
      %v819 = vpop.f32.mrb[0].mxu0
      %820 = vmatprep.mubr.bf16.mxu0 0
      %821 = vmatmul.mubr.bf16.gmra.mrb[0].mxu0 %v703
      %v822 = vpop.f32.mrb[0].mxu0
      %v823 = vadd.f32 %v731, %v822
      %v824 = vpop.f32.mrb[0].mxu0
      %v825 = vpop.f32.mrb[0].mxu0
      %v826 = vadd.f32 %v731, %v825
      %v827 = vpop.f32.mrb[0].mxu0
      %828 = vmatprep.mubr.bf16.mxu0 0
      %829 = vmatmul.mubr.bf16.gmra.mrb[0].mxu0 %v704
      %v830 = vpop.f32.mrb[0].mxu0
      %v831 = vadd.f32 %v731, %v830
      %v832 = vpop.f32.mrb[0].mxu0
      %v833 = vpop.f32.mrb[0].mxu0
      %v834 = vadd.f32 %v731, %v833
      %v835 = vpop.f32.mrb[0].mxu0
      %836 = vmatprep.mubr.bf16.mxu0 0
      %837 = vmatmul.mubr.bf16.gmra.mrb[0].mxu0 %v705
      %v838 = vpop.f32.mrb[0].mxu0
      %v839 = vadd.f32 %v731, %v838
      %v840 = vpop.f32.mrb[0].mxu0
      %v841 = vpop.f32.mrb[0].mxu0
      %v842 = vadd.f32 %v731, %v841
      %v843 = vpop.f32.mrb[0].mxu0
      %844 = vmatprep.mubr.bf16.mxu0 0
      %845 = vmatmul.mubr.bf16.gmra.mrb[0].mxu0 %v706
      %v846 = vpop.f32.mrb[0].mxu0
      %v847 = vadd.f32 %v731, %v846
      %v848 = vpop.f32.mrb[0].mxu0
      %v849 = vpop.f32.mrb[0].mxu0
      %v850 = vadd.f32 %v731, %v849
      %v851 = vpop.f32.mrb[0].mxu0
      %852 = vmatprep.mubr.bf16.mxu0 0
      %853 = vmatmul.mubr.bf16.gmra.mrb[0].mxu0 %v707
      %v854 = vpop.f32.mrb[0].mxu0
      %v855 = vadd.f32 %v731, %v854
      %v856 = vpop.f32.mrb[0].mxu0
      %v857 = vpop.f32.mrb[0].mxu0
      %v858 = vadd.f32 %v731, %v857
      %v859 = vpop.f32.mrb[0].mxu0
      %860 = vmatprep.mubr.bf16.mxu0 0
      %861 = vmatmul.mubr.bf16.gmra.mrb[0].mxu0 %v708
      %v862 = vpop.f32.mrb[0].mxu0
      %v863 = vadd.f32 %v731, %v862
      %v864 = vpop.f32.mrb[0].mxu0
      %v865 = vpop.f32.mrb[0].mxu0
      %v866 = vadd.f32 %v731, %v865
      %v867 = vpop.f32.mrb[0].mxu0
      %868 = vmatprep.mubr.bf16.mxu0 0
      %869 = vmatmul.mubr.bf16.gmra.mrb[0].mxu0 %v709
      %v870 = vpop.f32.mrb[0].mxu0
      %v871 = vadd.f32 %v731, %v870
      %v872 = vpop.f32.mrb[0].mxu0
      %v873 = vpop.f32.mrb[0].mxu0
      %v874 = vadd.f32 %v731, %v873
      %v875 = vpop.f32.mrb[0].mxu0
      %876 = vdwg.mxu0
      %s877 = scalar_lea.vmem %s2, 192
      %v878 = vld [vmem:[%s877] sm:$0xf]
      %v879 = vld [vmem:[%s877 + $0x4] sm:$0xf]
      %v880 = vld [vmem:[%s877 + $0x8] sm:$0xf]
      %v881 = vld [vmem:[%s877 + $0xc] sm:$0xf]
      %v882 = vld [vmem:[%s877 + $0x10] sm:$0xf]
      %v883 = vld [vmem:[%s877 + $0x14] sm:$0xf]
      %v884 = vld [vmem:[%s877 + $0x18] sm:$0xf]
      %v885 = vld [vmem:[%s877 + $0x1c] sm:$0xf]
      %v886 = vld [vmem:[%s877 + $0x20] sm:$0xf]
      %v887 = vld [vmem:[%s877 + $0x24] sm:$0xf]
      %v888 = vld [vmem:[%s877 + $0x28] sm:$0xf]
      %v889 = vld [vmem:[%s877 + $0x2c] sm:$0xf]
      %v890 = vld [vmem:[%s877 + $0x30] sm:$0xf]
      %v891 = vld [vmem:[%s877 + $0x34] sm:$0xf]
      %v892 = vld [vmem:[%s877 + $0x38] sm:$0xf]
      %v893 = vld [vmem:[%s877 + $0x3c] sm:$0xf]
      %v894 = vld [vmem:[%s3 + $0x3] sm:$0x1]
      %v895 = vlaneseq
      %v896 = vshrl.u32 %v895, 7
      %v897 = vsub.s32 0, %v896
      %v898 = vrot.slane %v894, %v897
      %v915 = vunpack.c.l.b16 %v878
      %v916 = vunpack.c.l.b16 %v879
      %v917 = vunpack.c.l.b16 %v880
      %v918 = vunpack.c.l.b16 %v881
      %v919 = vunpack.c.l.b16 %v882
      %v920 = vunpack.c.l.b16 %v883
      %v921 = vunpack.c.l.b16 %v884
      %v922 = vunpack.c.l.b16 %v885
      %v923 = vunpack.c.l.b16 %v886
      %v924 = vunpack.c.l.b16 %v887
      %v925 = vunpack.c.l.b16 %v888
      %v926 = vunpack.c.l.b16 %v889
      %v927 = vunpack.c.l.b16 %v890
      %v928 = vunpack.c.l.b16 %v891
      %v929 = vunpack.c.l.b16 %v892
      %v930 = vunpack.c.l.b16 %v893
      %v931 = vpack.c.b16 %v916, %v915
      %v932 = vpack.c.b16 %v918, %v917
      %v933 = vpack.c.b16 %v920, %v919
      %v934 = vpack.c.b16 %v922, %v921
      %v935 = vpack.c.b16 %v924, %v923
      %v936 = vpack.c.b16 %v926, %v925
      %v937 = vpack.c.b16 %v928, %v927
      %v938 = vpack.c.b16 %v930, %v929
      %947 = vmatprep.subr.bf16.mxu0 0
      %948 = vmatpush1.bf16.msra.mxu0 %v931
      %949 = vmatprep.subr.bf16.mxu0 0
      %950 = vmatpush1.bf16.msra.mxu0 %v932
      %951 = vmatprep.subr.bf16.mxu0 0
      %952 = vmatpush1.bf16.msra.mxu0 %v933
      %953 = vmatprep.subr.bf16.mxu0 0
      %954 = vmatpush1.bf16.msra.mxu0 %v934
      %955 = vmatprep.subr.bf16.mxu0 0
      %956 = vmatpush1.bf16.msra.mxu0 %v935
      %957 = vmatprep.subr.bf16.mxu0 0
      %958 = vmatpush1.bf16.msra.mxu0 %v936
      %959 = vmatprep.subr.bf16.mxu0 0
      %960 = vmatpush1.bf16.msra.mxu0 %v937
      %961 = vmatprep.subr.bf16.mxu0 0
      %962 = vmatpush1.bf16.msra.mxu0 %v938
      %963 = vmatprep.subr.bf16.mxu0 0
      %964 = vmatpush1.bf16.msra.mxu0 0
      %965 = vmatprep.subr.bf16.mxu0 0
      %966 = vmatpush1.bf16.msra.mxu0 0
      %967 = vmatprep.subr.bf16.mxu0 0
      %968 = vmatpush1.bf16.msra.mxu0 0
      %969 = vmatprep.subr.bf16.mxu0 0
      %970 = vmatpush1.bf16.msra.mxu0 0
      %971 = vmatprep.subr.bf16.mxu0 0
      %972 = vmatpush1.bf16.msra.mxu0 0
      %973 = vmatprep.subr.bf16.mxu0 0
      %974 = vmatpush1.bf16.msra.mxu0 0
      %975 = vmatprep.subr.bf16.mxu0 0
      %976 = vmatpush1.bf16.msra.mxu0 0
      %977 = vmatprep.subr.bf16.mxu0 0
      %978 = vmatpush1.bf16.msra.mxu0 0
      %979 = vmatprep.mubr.bf16.mxu0 0
      %980 = vmatmul.mubr.bf16.gmra.mrb[0].mxu0 %v702
      %v981 = vpop.f32.mrb[0].mxu0
      %v982 = vadd.f32 %v898, %v981
      %v983 = vpop.f32.mrb[0].mxu0
      %v984 = vpop.f32.mrb[0].mxu0
      %v985 = vadd.f32 %v898, %v984
      %v986 = vpop.f32.mrb[0].mxu0
      %987 = vmatprep.mubr.bf16.mxu0 0
      %988 = vmatmul.mubr.bf16.gmra.mrb[0].mxu0 %v703
      %v989 = vpop.f32.mrb[0].mxu0
      %v990 = vadd.f32 %v898, %v989
      %v991 = vpop.f32.mrb[0].mxu0
      %v992 = vpop.f32.mrb[0].mxu0
      %v993 = vadd.f32 %v898, %v992
      %v994 = vpop.f32.mrb[0].mxu0
      %995 = vmatprep.mubr.bf16.mxu0 0
      %996 = vmatmul.mubr.bf16.gmra.mrb[0].mxu0 %v704
      %v997 = vpop.f32.mrb[0].mxu0
      %v998 = vadd.f32 %v898, %v997
      %v999 = vpop.f32.mrb[0].mxu0
      %v1000 = vpop.f32.mrb[0].mxu0
      %v1001 = vadd.f32 %v898, %v1000
      %v1002 = vpop.f32.mrb[0].mxu0
      %1003 = vmatprep.mubr.bf16.mxu0 0
      %1004 = vmatmul.mubr.bf16.gmra.mrb[0].mxu0 %v705
      %v1005 = vpop.f32.mrb[0].mxu0
      %v1006 = vadd.f32 %v898, %v1005
      %v1007 = vpop.f32.mrb[0].mxu0
      %v1008 = vpop.f32.mrb[0].mxu0
      %v1009 = vadd.f32 %v898, %v1008
      %v1010 = vpop.f32.mrb[0].mxu0
      %1011 = vmatprep.mubr.bf16.mxu0 0
      %1012 = vmatmul.mubr.bf16.gmra.mrb[0].mxu0 %v706
      %v1013 = vpop.f32.mrb[0].mxu0
      %v1014 = vadd.f32 %v898, %v1013
      %v1015 = vpop.f32.mrb[0].mxu0
      %v1016 = vpop.f32.mrb[0].mxu0
      %v1017 = vadd.f32 %v898, %v1016
      %v1018 = vpop.f32.mrb[0].mxu0
      %1019 = vmatprep.mubr.bf16.mxu0 0
      %1020 = vmatmul.mubr.bf16.gmra.mrb[0].mxu0 %v707
      %v1021 = vpop.f32.mrb[0].mxu0
      %v1022 = vadd.f32 %v898, %v1021
      %v1023 = vpop.f32.mrb[0].mxu0
      %v1024 = vpop.f32.mrb[0].mxu0
      %v1025 = vadd.f32 %v898, %v1024
      %v1026 = vpop.f32.mrb[0].mxu0
      %1027 = vmatprep.mubr.bf16.mxu0 0
      %1028 = vmatmul.mubr.bf16.gmra.mrb[0].mxu0 %v708
      %v1029 = vpop.f32.mrb[0].mxu0
      %v1030 = vadd.f32 %v898, %v1029
      %v1031 = vpop.f32.mrb[0].mxu0
      %v1032 = vpop.f32.mrb[0].mxu0
      %v1033 = vadd.f32 %v898, %v1032
      %v1034 = vpop.f32.mrb[0].mxu0
      %1035 = vmatprep.mubr.bf16.mxu0 0
      %1036 = vmatmul.mubr.bf16.gmra.mrb[0].mxu0 %v709
      %v1037 = vpop.f32.mrb[0].mxu0
      %v1038 = vadd.f32 %v898, %v1037
      %v1039 = vpop.f32.mrb[0].mxu0
      %v1040 = vpop.f32.mrb[0].mxu0
      %v1041 = vadd.f32 %v898, %v1040
      %v1042 = vpop.f32.mrb[0].mxu0
      %1043 = vdwg.mxu0
      %v1044 = vld [vmem:[%s250] sm:$0xff]
      %v1045 = vld [vmem:[%s250 + $0x8] sm:$0xff]
      %v1046 = vld [vmem:[%s250 + $0x10] sm:$0xff]
      %v1047 = vld [vmem:[%s250 + $0x18] sm:$0xff]
      %v1048 = vld [vmem:[%s250 + $0x20] sm:$0xff]
      %v1049 = vld [vmem:[%s250 + $0x28] sm:$0xff]
      %v1050 = vld [vmem:[%s250 + $0x30] sm:$0xff]
      %v1051 = vld [vmem:[%s250 + $0x38] sm:$0xff]
      %v1052 = vld [vmem:[%s250 + $0x40] sm:$0xff]
      %v1053 = vld [vmem:[%s250 + $0x48] sm:$0xff]
      %v1054 = vld [vmem:[%s250 + $0x50] sm:$0xff]
      %v1055 = vld [vmem:[%s250 + $0x58] sm:$0xff]
      %v1056 = vld [vmem:[%s250 + $0x60] sm:$0xff]
      %v1057 = vld [vmem:[%s250 + $0x68] sm:$0xff]
      %v1058 = vld [vmem:[%s250 + $0x70] sm:$0xff]
      %v1059 = vld [vmem:[%s250 + $0x78] sm:$0xff]
      %v1060 = vmul.f32 %v982, 0.5
      %v1061 = vmul.f32 %v985, 0.5
      %v1062 = vmul.f32 %v990, 0.5
      %v1063 = vmul.f32 %v993, 0.5
      %v1064 = vmul.f32 %v998, 0.5
      %v1065 = vmul.f32 %v1001, 0.5
      %v1066 = vmul.f32 %v1006, 0.5
      %v1067 = vmul.f32 %v1009, 0.5
      %v1068 = vmul.f32 %v1014, 0.5
      %v1069 = vmul.f32 %v1017, 0.5
      %v1070 = vmul.f32 %v1022, 0.5
      %v1071 = vmul.f32 %v1025, 0.5
      %v1072 = vmul.f32 %v1030, 0.5
      %v1073 = vmul.f32 %v1033, 0.5
      %v1074 = vmul.f32 %v1038, 0.5
      %v1075 = vmul.f32 %v1041, 0.5
      %v1076 = vmul.f32 %v1060, 1.442695
      %v1077 = vpow.pop %v1076
      %v1078 = vmul.f32 %v1061, 1.442695
      %v1079 = vpow.pop %v1078
      %v1080 = vmul.f32 %v1062, 1.442695
      %v1081 = vpow.pop %v1080
      %v1082 = vmul.f32 %v1063, 1.442695
      %v1083 = vpow.pop %v1082
      %v1084 = vmul.f32 %v1064, 1.442695
      %v1085 = vpow.pop %v1084
      %v1086 = vmul.f32 %v1065, 1.442695
      %v1087 = vpow.pop %v1086
      %v1088 = vmul.f32 %v1066, 1.442695
      %v1089 = vpow.pop %v1088
      %v1090 = vmul.f32 %v1067, 1.442695
      %v1091 = vpow.pop %v1090
      %v1092 = vmul.f32 %v1068, 1.442695
      %v1093 = vpow.pop %v1092
      %v1094 = vmul.f32 %v1069, 1.442695
      %v1095 = vpow.pop %v1094
      %v1096 = vmul.f32 %v1070, 1.442695
      %v1097 = vpow.pop %v1096
      %v1098 = vmul.f32 %v1071, 1.442695
      %v1099 = vpow.pop %v1098
      %v1100 = vmul.f32 %v1072, 1.442695
      %v1101 = vpow.pop %v1100
      %v1102 = vmul.f32 %v1073, 1.442695
      %v1103 = vpow.pop %v1102
      %v1104 = vmul.f32 %v1074, 1.442695
      %v1105 = vpow.pop %v1104
      %v1106 = vmul.f32 %v1075, 1.442695
      %v1107 = vpow.pop %v1106
      %v1108 = vmul.f32 %v815, %v1077
      %v1109 = vmul.f32 %v818, %v1079
      %v1110 = vmul.f32 %v823, %v1081
      %v1111 = vmul.f32 %v826, %v1083
      %v1112 = vmul.f32 %v831, %v1085
      %v1113 = vmul.f32 %v834, %v1087
      %v1114 = vmul.f32 %v839, %v1089
      %v1115 = vmul.f32 %v842, %v1091
      %v1116 = vmul.f32 %v847, %v1093
      %v1117 = vmul.f32 %v850, %v1095
      %v1118 = vmul.f32 %v855, %v1097
      %v1119 = vmul.f32 %v858, %v1099
      %v1120 = vmul.f32 %v863, %v1101
      %v1121 = vmul.f32 %v866, %v1103
      %v1122 = vmul.f32 %v871, %v1105
      %v1123 = vmul.f32 %v874, %v1107
      %v1124 = vadd.f32 %v1044, %v1108
      %v1125 = vadd.f32 %v1045, %v1109
      %v1126 = vadd.f32 %v1046, %v1110
      %v1127 = vadd.f32 %v1047, %v1111
      %v1128 = vadd.f32 %v1048, %v1112
      %v1129 = vadd.f32 %v1049, %v1113
      %v1130 = vadd.f32 %v1050, %v1114
      %v1131 = vadd.f32 %v1051, %v1115
      %v1132 = vadd.f32 %v1052, %v1116
      %v1133 = vadd.f32 %v1053, %v1117
      %v1134 = vadd.f32 %v1054, %v1118
      %v1135 = vadd.f32 %v1055, %v1119
      %v1136 = vadd.f32 %v1056, %v1120
      %v1137 = vadd.f32 %v1057, %v1121
      %v1138 = vadd.f32 %v1058, %v1122
      %v1139 = vadd.f32 %v1059, %v1123
      %v1140 = vmul.f32 %v982, 1.442695
      %v1141 = vpow.pop %v1140
      %v1142 = vmul.f32 %v985, 1.442695
      %v1143 = vpow.pop %v1142
      %v1144 = vmul.f32 %v990, 1.442695
      %v1145 = vpow.pop %v1144
      %v1146 = vmul.f32 %v993, 1.442695
      %v1147 = vpow.pop %v1146
      %v1148 = vmul.f32 %v998, 1.442695
      %v1149 = vpow.pop %v1148
      %v1150 = vmul.f32 %v1001, 1.442695
      %v1151 = vpow.pop %v1150
      %v1152 = vmul.f32 %v1006, 1.442695
      %v1153 = vpow.pop %v1152
      %v1154 = vmul.f32 %v1009, 1.442695
      %v1155 = vpow.pop %v1154
      %v1156 = vmul.f32 %v1014, 1.442695
      %v1157 = vpow.pop %v1156
      %v1158 = vmul.f32 %v1017, 1.442695
      %v1159 = vpow.pop %v1158
      %v1160 = vmul.f32 %v1022, 1.442695
      %v1161 = vpow.pop %v1160
      %v1162 = vmul.f32 %v1025, 1.442695
      %v1163 = vpow.pop %v1162
      %v1164 = vmul.f32 %v1030, 1.442695
      %v1165 = vpow.pop %v1164
      %v1166 = vmul.f32 %v1033, 1.442695
      %v1167 = vpow.pop %v1166
      %v1168 = vmul.f32 %v1038, 1.442695
      %v1169 = vpow.pop %v1168
      %v1170 = vmul.f32 %v1041, 1.442695
      %v1171 = vpow.pop %v1170
      %v1172 = vmul.f32 %v815, %v815
      %v1173 = vmul.f32 %v818, %v818
      %v1174 = vmul.f32 %v823, %v823
      %v1175 = vmul.f32 %v826, %v826
      %v1176 = vmul.f32 %v831, %v831
      %v1177 = vmul.f32 %v834, %v834
      %v1178 = vmul.f32 %v839, %v839
      %v1179 = vmul.f32 %v842, %v842
      %v1180 = vmul.f32 %v847, %v847
      %v1181 = vmul.f32 %v850, %v850
      %v1182 = vmul.f32 %v855, %v855
      %v1183 = vmul.f32 %v858, %v858
      %v1184 = vmul.f32 %v863, %v863
      %v1185 = vmul.f32 %v866, %v866
      %v1186 = vmul.f32 %v871, %v871
      %v1187 = vmul.f32 %v874, %v874
      %v1188 = vadd.f32 %v1141, %v1172
      %v1189 = vadd.f32 %v1143, %v1173
      %v1190 = vadd.f32 %v1145, %v1174
      %v1191 = vadd.f32 %v1147, %v1175
      %v1192 = vadd.f32 %v1149, %v1176
      %v1193 = vadd.f32 %v1151, %v1177
      %v1194 = vadd.f32 %v1153, %v1178
      %v1195 = vadd.f32 %v1155, %v1179
      %v1196 = vadd.f32 %v1157, %v1180
      %v1197 = vadd.f32 %v1159, %v1181
      %v1198 = vadd.f32 %v1161, %v1182
      %v1199 = vadd.f32 %v1163, %v1183
      %v1200 = vadd.f32 %v1165, %v1184
      %v1201 = vadd.f32 %v1167, %v1185
      %v1202 = vadd.f32 %v1169, %v1186
      %v1203 = vadd.f32 %v1171, %v1187
      %v1204 = vsub.f32 %v1188, 1.0
      %v1205 = vsub.f32 %v1189, 1.0
      %v1206 = vsub.f32 %v1190, 1.0
      %v1207 = vsub.f32 %v1191, 1.0
      %v1208 = vsub.f32 %v1192, 1.0
      %v1209 = vsub.f32 %v1193, 1.0
      %v1210 = vsub.f32 %v1194, 1.0
      %v1211 = vsub.f32 %v1195, 1.0
      %v1212 = vsub.f32 %v1196, 1.0
      %v1213 = vsub.f32 %v1197, 1.0
      %v1214 = vsub.f32 %v1198, 1.0
      %v1215 = vsub.f32 %v1199, 1.0
      %v1216 = vsub.f32 %v1200, 1.0
      %v1217 = vsub.f32 %v1201, 1.0
      %v1218 = vsub.f32 %v1202, 1.0
      %v1219 = vsub.f32 %v1203, 1.0
      %v1220 = vsub.f32 %v1204, %v982
      %v1221 = vsub.f32 %v1205, %v985
      %v1222 = vsub.f32 %v1206, %v990
      %v1223 = vsub.f32 %v1207, %v993
      %v1224 = vsub.f32 %v1208, %v998
      %v1225 = vsub.f32 %v1209, %v1001
      %v1226 = vsub.f32 %v1210, %v1006
      %v1227 = vsub.f32 %v1211, %v1009
      %v1228 = vsub.f32 %v1212, %v1014
      %v1229 = vsub.f32 %v1213, %v1017
      %v1230 = vsub.f32 %v1214, %v1022
      %v1231 = vsub.f32 %v1215, %v1025
      %v1232 = vsub.f32 %v1216, %v1030
      %v1233 = vsub.f32 %v1217, %v1033
      %v1234 = vsub.f32 %v1218, %v1038
      %v1235 = vsub.f32 %v1219, %v1041
      %1236 = vadd.xlane.f32.xlu0 %v1220
      %v1237 = vpop.xlane.xlu0 %1236
      %1238 = vadd.xlane.f32.xlu0 %v1221
      %v1239 = vpop.xlane.xlu0 %1238
      %1240 = vadd.xlane.f32.xlu0 %v1222
      %v1241 = vpop.xlane.xlu0 %1240
      %1242 = vadd.xlane.f32.xlu0 %v1223
      %v1243 = vpop.xlane.xlu0 %1242
      %1244 = vadd.xlane.f32.xlu0 %v1224
      %v1245 = vpop.xlane.xlu0 %1244
      %1246 = vadd.xlane.f32.xlu0 %v1225
      %v1247 = vpop.xlane.xlu0 %1246
      %1248 = vadd.xlane.f32.xlu0 %v1226
      %v1249 = vpop.xlane.xlu0 %1248
      %1250 = vadd.xlane.f32.xlu0 %v1227
      %v1251 = vpop.xlane.xlu0 %1250
      %1252 = vadd.xlane.f32.xlu0 %v1228
      %v1253 = vpop.xlane.xlu0 %1252
      %1254 = vadd.xlane.f32.xlu0 %v1229
      %v1255 = vpop.xlane.xlu0 %1254
      %1256 = vadd.xlane.f32.xlu0 %v1230
      %v1257 = vpop.xlane.xlu0 %1256
      %1258 = vadd.xlane.f32.xlu0 %v1231
      %v1259 = vpop.xlane.xlu0 %1258
      %1260 = vadd.xlane.f32.xlu0 %v1232
      %v1261 = vpop.xlane.xlu0 %1260
      %1262 = vadd.xlane.f32.xlu0 %v1233
      %v1263 = vpop.xlane.xlu0 %1262
      %1264 = vadd.xlane.f32.xlu0 %v1234
      %v1265 = vpop.xlane.xlu0 %1264
      %1266 = vadd.xlane.f32.xlu0 %v1235
      %v1267 = vpop.xlane.xlu0 %1266
      %1268 = vst [vmem:[%s262] sm:$0xff] %v1237
      %1269 = vst [vmem:[%s262 + $0x8] sm:$0xff] %v1239
      %1270 = vst [vmem:[%s262 + $0x10] sm:$0xff] %v1241
      %1271 = vst [vmem:[%s262 + $0x18] sm:$0xff] %v1243
      %1272 = vst [vmem:[%s262 + $0x20] sm:$0xff] %v1245
      %1273 = vst [vmem:[%s262 + $0x28] sm:$0xff] %v1247
      %1274 = vst [vmem:[%s262 + $0x30] sm:$0xff] %v1249
      %1275 = vst [vmem:[%s262 + $0x38] sm:$0xff] %v1251
      %1276 = vst [vmem:[%s262 + $0x40] sm:$0xff] %v1253
      %1277 = vst [vmem:[%s262 + $0x48] sm:$0xff] %v1255
      %1278 = vst [vmem:[%s262 + $0x50] sm:$0xff] %v1257
      %1279 = vst [vmem:[%s262 + $0x58] sm:$0xff] %v1259
      %1280 = vst [vmem:[%s262 + $0x60] sm:$0xff] %v1261
      %1281 = vst [vmem:[%s262 + $0x68] sm:$0xff] %v1263
      %1282 = vst [vmem:[%s262 + $0x70] sm:$0xff] %v1265
      %1283 = vst [vmem:[%s262 + $0x78] sm:$0xff] %v1267
      %v1284 = vpack.c.bf16 %v1125, %v1124
      %v1285 = vpack.c.bf16 %v1127, %v1126
      %v1286 = vpack.c.bf16 %v1129, %v1128
      %v1287 = vpack.c.bf16 %v1131, %v1130
      %v1288 = vpack.c.bf16 %v1133, %v1132
      %v1289 = vpack.c.bf16 %v1135, %v1134
      %v1290 = vpack.c.bf16 %v1137, %v1136
      %v1291 = vpack.c.bf16 %v1139, %v1138
      %s1292 = scalar_lea.vmem %s2, 256
      %v1293 = vld [vmem:[%s1292] sm:$0xf]
      %v1294 = vld [vmem:[%s1292 + $0x4] sm:$0xf]
      %v1295 = vld [vmem:[%s1292 + $0x8] sm:$0xf]
      %v1296 = vld [vmem:[%s1292 + $0xc] sm:$0xf]
      %v1297 = vld [vmem:[%s1292 + $0x10] sm:$0xf]
      %v1298 = vld [vmem:[%s1292 + $0x14] sm:$0xf]
      %v1299 = vld [vmem:[%s1292 + $0x18] sm:$0xf]
      %v1300 = vld [vmem:[%s1292 + $0x1c] sm:$0xf]
      %v1301 = vld [vmem:[%s1292 + $0x20] sm:$0xf]
      %v1302 = vld [vmem:[%s1292 + $0x24] sm:$0xf]
      %v1303 = vld [vmem:[%s1292 + $0x28] sm:$0xf]
      %v1304 = vld [vmem:[%s1292 + $0x2c] sm:$0xf]
      %v1305 = vld [vmem:[%s1292 + $0x30] sm:$0xf]
      %v1306 = vld [vmem:[%s1292 + $0x34] sm:$0xf]
      %v1307 = vld [vmem:[%s1292 + $0x38] sm:$0xf]
      %v1308 = vld [vmem:[%s1292 + $0x3c] sm:$0xf]
      %v1309 = vld [vmem:[%s3 + $0x4] sm:$0x1]
      %v1310 = vlaneseq
      %v1311 = vshrl.u32 %v1310, 7
      %v1312 = vsub.s32 0, %v1311
      %v1313 = vrot.slane %v1309, %v1312
      %v1330 = vunpack.c.l.b16 %v1293
      %v1331 = vunpack.c.l.b16 %v1294
      %v1332 = vunpack.c.l.b16 %v1295
      %v1333 = vunpack.c.l.b16 %v1296
      %v1334 = vunpack.c.l.b16 %v1297
      %v1335 = vunpack.c.l.b16 %v1298
      %v1336 = vunpack.c.l.b16 %v1299
      %v1337 = vunpack.c.l.b16 %v1300
      %v1338 = vunpack.c.l.b16 %v1301
      %v1339 = vunpack.c.l.b16 %v1302
      %v1340 = vunpack.c.l.b16 %v1303
      %v1341 = vunpack.c.l.b16 %v1304
      %v1342 = vunpack.c.l.b16 %v1305
      %v1343 = vunpack.c.l.b16 %v1306
      %v1344 = vunpack.c.l.b16 %v1307
      %v1345 = vunpack.c.l.b16 %v1308
      %v1346 = vpack.c.b16 %v1331, %v1330
      %v1347 = vpack.c.b16 %v1333, %v1332
      %v1348 = vpack.c.b16 %v1335, %v1334
      %v1349 = vpack.c.b16 %v1337, %v1336
      %v1350 = vpack.c.b16 %v1339, %v1338
      %v1351 = vpack.c.b16 %v1341, %v1340
      %v1352 = vpack.c.b16 %v1343, %v1342
      %v1353 = vpack.c.b16 %v1345, %v1344
      %1362 = vmatprep.subr.bf16.mxu0 0
      %1363 = vmatpush1.bf16.msra.mxu0 %v1346
      %1364 = vmatprep.subr.bf16.mxu0 0
      %1365 = vmatpush1.bf16.msra.mxu0 %v1347
      %1366 = vmatprep.subr.bf16.mxu0 0
      %1367 = vmatpush1.bf16.msra.mxu0 %v1348
      %1368 = vmatprep.subr.bf16.mxu0 0
      %1369 = vmatpush1.bf16.msra.mxu0 %v1349
      %1370 = vmatprep.subr.bf16.mxu0 0
      %1371 = vmatpush1.bf16.msra.mxu0 %v1350
      %1372 = vmatprep.subr.bf16.mxu0 0
      %1373 = vmatpush1.bf16.msra.mxu0 %v1351
      %1374 = vmatprep.subr.bf16.mxu0 0
      %1375 = vmatpush1.bf16.msra.mxu0 %v1352
      %1376 = vmatprep.subr.bf16.mxu0 0
      %1377 = vmatpush1.bf16.msra.mxu0 %v1353
      %1378 = vmatprep.subr.bf16.mxu0 0
      %1379 = vmatpush1.bf16.msra.mxu0 0
      %1380 = vmatprep.subr.bf16.mxu0 0
      %1381 = vmatpush1.bf16.msra.mxu0 0
      %1382 = vmatprep.subr.bf16.mxu0 0
      %1383 = vmatpush1.bf16.msra.mxu0 0
      %1384 = vmatprep.subr.bf16.mxu0 0
      %1385 = vmatpush1.bf16.msra.mxu0 0
      %1386 = vmatprep.subr.bf16.mxu0 0
      %1387 = vmatpush1.bf16.msra.mxu0 0
      %1388 = vmatprep.subr.bf16.mxu0 0
      %1389 = vmatpush1.bf16.msra.mxu0 0
      %1390 = vmatprep.subr.bf16.mxu0 0
      %1391 = vmatpush1.bf16.msra.mxu0 0
      %1392 = vmatprep.subr.bf16.mxu0 0
      %1393 = vmatpush1.bf16.msra.mxu0 0
      %1394 = vmatprep.mubr.bf16.mxu0 0
      %1395 = vmatmul.mubr.bf16.gmra.mrb[0].mxu0 %v1284
      %v1396 = vpop.f32.mrb[0].mxu0
      %v1397 = vadd.f32 %v1313, %v1396
      %v1398 = vpop.f32.mrb[0].mxu0
      %v1399 = vpop.f32.mrb[0].mxu0
      %v1400 = vadd.f32 %v1313, %v1399
      %v1401 = vpop.f32.mrb[0].mxu0
      %1402 = vmatprep.mubr.bf16.mxu0 0
      %1403 = vmatmul.mubr.bf16.gmra.mrb[0].mxu0 %v1285
      %v1404 = vpop.f32.mrb[0].mxu0
      %v1405 = vadd.f32 %v1313, %v1404
      %v1406 = vpop.f32.mrb[0].mxu0
      %v1407 = vpop.f32.mrb[0].mxu0
      %v1408 = vadd.f32 %v1313, %v1407
      %v1409 = vpop.f32.mrb[0].mxu0
      %1410 = vmatprep.mubr.bf16.mxu0 0
      %1411 = vmatmul.mubr.bf16.gmra.mrb[0].mxu0 %v1286
      %v1412 = vpop.f32.mrb[0].mxu0
      %v1413 = vadd.f32 %v1313, %v1412
      %v1414 = vpop.f32.mrb[0].mxu0
      %v1415 = vpop.f32.mrb[0].mxu0
      %v1416 = vadd.f32 %v1313, %v1415
      %v1417 = vpop.f32.mrb[0].mxu0
      %1418 = vmatprep.mubr.bf16.mxu0 0
      %1419 = vmatmul.mubr.bf16.gmra.mrb[0].mxu0 %v1287
      %v1420 = vpop.f32.mrb[0].mxu0
      %v1421 = vadd.f32 %v1313, %v1420
      %v1422 = vpop.f32.mrb[0].mxu0
      %v1423 = vpop.f32.mrb[0].mxu0
      %v1424 = vadd.f32 %v1313, %v1423
      %v1425 = vpop.f32.mrb[0].mxu0
      %1426 = vmatprep.mubr.bf16.mxu0 0
      %1427 = vmatmul.mubr.bf16.gmra.mrb[0].mxu0 %v1288
      %v1428 = vpop.f32.mrb[0].mxu0
      %v1429 = vadd.f32 %v1313, %v1428
      %v1430 = vpop.f32.mrb[0].mxu0
      %v1431 = vpop.f32.mrb[0].mxu0
      %v1432 = vadd.f32 %v1313, %v1431
      %v1433 = vpop.f32.mrb[0].mxu0
      %1434 = vmatprep.mubr.bf16.mxu0 0
      %1435 = vmatmul.mubr.bf16.gmra.mrb[0].mxu0 %v1289
      %v1436 = vpop.f32.mrb[0].mxu0
      %v1437 = vadd.f32 %v1313, %v1436
      %v1438 = vpop.f32.mrb[0].mxu0
      %v1439 = vpop.f32.mrb[0].mxu0
      %v1440 = vadd.f32 %v1313, %v1439
      %v1441 = vpop.f32.mrb[0].mxu0
      %1442 = vmatprep.mubr.bf16.mxu0 0
      %1443 = vmatmul.mubr.bf16.gmra.mrb[0].mxu0 %v1290
      %v1444 = vpop.f32.mrb[0].mxu0
      %v1445 = vadd.f32 %v1313, %v1444
      %v1446 = vpop.f32.mrb[0].mxu0
      %v1447 = vpop.f32.mrb[0].mxu0
      %v1448 = vadd.f32 %v1313, %v1447
      %v1449 = vpop.f32.mrb[0].mxu0
      %1450 = vmatprep.mubr.bf16.mxu0 0
      %1451 = vmatmul.mubr.bf16.gmra.mrb[0].mxu0 %v1291
      %v1452 = vpop.f32.mrb[0].mxu0
      %v1453 = vadd.f32 %v1313, %v1452
      %v1454 = vpop.f32.mrb[0].mxu0
      %v1455 = vpop.f32.mrb[0].mxu0
      %v1456 = vadd.f32 %v1313, %v1455
      %v1457 = vpop.f32.mrb[0].mxu0
      %1458 = vdwg.mxu0
      %v1459 = vmax.f32 %v1397, 0.0
      %v1460 = vmax.f32 %v1400, 0.0
      %v1461 = vmax.f32 %v1405, 0.0
      %v1462 = vmax.f32 %v1408, 0.0
      %v1463 = vmax.f32 %v1413, 0.0
      %v1464 = vmax.f32 %v1416, 0.0
      %v1465 = vmax.f32 %v1421, 0.0
      %v1466 = vmax.f32 %v1424, 0.0
      %v1467 = vmax.f32 %v1429, 0.0
      %v1468 = vmax.f32 %v1432, 0.0
      %v1469 = vmax.f32 %v1437, 0.0
      %v1470 = vmax.f32 %v1440, 0.0
      %v1471 = vmax.f32 %v1445, 0.0
      %v1472 = vmax.f32 %v1448, 0.0
      %v1473 = vmax.f32 %v1453, 0.0
      %v1474 = vmax.f32 %v1456, 0.0
      %v1475 = vpack.c.bf16 %v1460, %v1459
      %v1476 = vpack.c.bf16 %v1462, %v1461
      %v1477 = vpack.c.bf16 %v1464, %v1463
      %v1478 = vpack.c.bf16 %v1466, %v1465
      %v1479 = vpack.c.bf16 %v1468, %v1467
      %v1480 = vpack.c.bf16 %v1470, %v1469
      %v1481 = vpack.c.bf16 %v1472, %v1471
      %v1482 = vpack.c.bf16 %v1474, %v1473
      %s1483 = scalar_lea.vmem %s2, 320
      %v1484 = vld [vmem:[%s1483] sm:$0xf]
      %v1485 = vld [vmem:[%s1483 + $0x4] sm:$0xf]
      %v1486 = vld [vmem:[%s1483 + $0x8] sm:$0xf]
      %v1487 = vld [vmem:[%s1483 + $0xc] sm:$0xf]
      %v1488 = vld [vmem:[%s1483 + $0x10] sm:$0xf]
      %v1489 = vld [vmem:[%s1483 + $0x14] sm:$0xf]
      %v1490 = vld [vmem:[%s1483 + $0x18] sm:$0xf]
      %v1491 = vld [vmem:[%s1483 + $0x1c] sm:$0xf]
      %v1492 = vld [vmem:[%s1483 + $0x20] sm:$0xf]
      %v1493 = vld [vmem:[%s1483 + $0x24] sm:$0xf]
      %v1494 = vld [vmem:[%s1483 + $0x28] sm:$0xf]
      %v1495 = vld [vmem:[%s1483 + $0x2c] sm:$0xf]
      %v1496 = vld [vmem:[%s1483 + $0x30] sm:$0xf]
      %v1497 = vld [vmem:[%s1483 + $0x34] sm:$0xf]
      %v1498 = vld [vmem:[%s1483 + $0x38] sm:$0xf]
      %v1499 = vld [vmem:[%s1483 + $0x3c] sm:$0xf]
      %v1500 = vld [vmem:[%s3 + $0x5] sm:$0x1]
      %v1501 = vlaneseq
      %v1502 = vshrl.u32 %v1501, 7
      %v1503 = vsub.s32 0, %v1502
      %v1504 = vrot.slane %v1500, %v1503
      %v1521 = vunpack.c.l.b16 %v1484
      %v1522 = vunpack.c.l.b16 %v1485
      %v1523 = vunpack.c.l.b16 %v1486
      %v1524 = vunpack.c.l.b16 %v1487
      %v1525 = vunpack.c.l.b16 %v1488
      %v1526 = vunpack.c.l.b16 %v1489
      %v1527 = vunpack.c.l.b16 %v1490
      %v1528 = vunpack.c.l.b16 %v1491
      %v1529 = vunpack.c.l.b16 %v1492
      %v1530 = vunpack.c.l.b16 %v1493
      %v1531 = vunpack.c.l.b16 %v1494
      %v1532 = vunpack.c.l.b16 %v1495
      %v1533 = vunpack.c.l.b16 %v1496
      %v1534 = vunpack.c.l.b16 %v1497
      %v1535 = vunpack.c.l.b16 %v1498
      %v1536 = vunpack.c.l.b16 %v1499
      %v1537 = vpack.c.b16 %v1522, %v1521
      %v1538 = vpack.c.b16 %v1524, %v1523
      %v1539 = vpack.c.b16 %v1526, %v1525
      %v1540 = vpack.c.b16 %v1528, %v1527
      %v1541 = vpack.c.b16 %v1530, %v1529
      %v1542 = vpack.c.b16 %v1532, %v1531
      %v1543 = vpack.c.b16 %v1534, %v1533
      %v1544 = vpack.c.b16 %v1536, %v1535
      %1553 = vmatprep.subr.bf16.mxu0 0
      %1554 = vmatpush1.bf16.msra.mxu0 %v1537
      %1555 = vmatprep.subr.bf16.mxu0 0
      %1556 = vmatpush1.bf16.msra.mxu0 %v1538
      %1557 = vmatprep.subr.bf16.mxu0 0
      %1558 = vmatpush1.bf16.msra.mxu0 %v1539
      %1559 = vmatprep.subr.bf16.mxu0 0
      %1560 = vmatpush1.bf16.msra.mxu0 %v1540
      %1561 = vmatprep.subr.bf16.mxu0 0
      %1562 = vmatpush1.bf16.msra.mxu0 %v1541
      %1563 = vmatprep.subr.bf16.mxu0 0
      %1564 = vmatpush1.bf16.msra.mxu0 %v1542
      %1565 = vmatprep.subr.bf16.mxu0 0
      %1566 = vmatpush1.bf16.msra.mxu0 %v1543
      %1567 = vmatprep.subr.bf16.mxu0 0
      %1568 = vmatpush1.bf16.msra.mxu0 %v1544
      %1569 = vmatprep.subr.bf16.mxu0 0
      %1570 = vmatpush1.bf16.msra.mxu0 0
      %1571 = vmatprep.subr.bf16.mxu0 0
      %1572 = vmatpush1.bf16.msra.mxu0 0
      %1573 = vmatprep.subr.bf16.mxu0 0
      %1574 = vmatpush1.bf16.msra.mxu0 0
      %1575 = vmatprep.subr.bf16.mxu0 0
      %1576 = vmatpush1.bf16.msra.mxu0 0
      %1577 = vmatprep.subr.bf16.mxu0 0
      %1578 = vmatpush1.bf16.msra.mxu0 0
      %1579 = vmatprep.subr.bf16.mxu0 0
      %1580 = vmatpush1.bf16.msra.mxu0 0
      %1581 = vmatprep.subr.bf16.mxu0 0
      %1582 = vmatpush1.bf16.msra.mxu0 0
      %1583 = vmatprep.subr.bf16.mxu0 0
      %1584 = vmatpush1.bf16.msra.mxu0 0
      %1585 = vmatprep.mubr.bf16.mxu0 0
      %1586 = vmatmul.mubr.bf16.gmra.mrb[0].mxu0 %v1475
      %v1587 = vpop.f32.mrb[0].mxu0
      %v1588 = vadd.f32 %v1504, %v1587
      %v1589 = vpop.f32.mrb[0].mxu0
      %v1590 = vpop.f32.mrb[0].mxu0
      %v1591 = vadd.f32 %v1504, %v1590
      %v1592 = vpop.f32.mrb[0].mxu0
      %1593 = vmatprep.mubr.bf16.mxu0 0
      %1594 = vmatmul.mubr.bf16.gmra.mrb[0].mxu0 %v1476
      %v1595 = vpop.f32.mrb[0].mxu0
      %v1596 = vadd.f32 %v1504, %v1595
      %v1597 = vpop.f32.mrb[0].mxu0
      %v1598 = vpop.f32.mrb[0].mxu0
      %v1599 = vadd.f32 %v1504, %v1598
      %v1600 = vpop.f32.mrb[0].mxu0
      %1601 = vmatprep.mubr.bf16.mxu0 0
      %1602 = vmatmul.mubr.bf16.gmra.mrb[0].mxu0 %v1477
      %v1603 = vpop.f32.mrb[0].mxu0
      %v1604 = vadd.f32 %v1504, %v1603
      %v1605 = vpop.f32.mrb[0].mxu0
      %v1606 = vpop.f32.mrb[0].mxu0
      %v1607 = vadd.f32 %v1504, %v1606
      %v1608 = vpop.f32.mrb[0].mxu0
      %1609 = vmatprep.mubr.bf16.mxu0 0
      %1610 = vmatmul.mubr.bf16.gmra.mrb[0].mxu0 %v1478
      %v1611 = vpop.f32.mrb[0].mxu0
      %v1612 = vadd.f32 %v1504, %v1611
      %v1613 = vpop.f32.mrb[0].mxu0
      %v1614 = vpop.f32.mrb[0].mxu0
      %v1615 = vadd.f32 %v1504, %v1614
      %v1616 = vpop.f32.mrb[0].mxu0
      %1617 = vmatprep.mubr.bf16.mxu0 0
      %1618 = vmatmul.mubr.bf16.gmra.mrb[0].mxu0 %v1479
      %v1619 = vpop.f32.mrb[0].mxu0
      %v1620 = vadd.f32 %v1504, %v1619
      %v1621 = vpop.f32.mrb[0].mxu0
      %v1622 = vpop.f32.mrb[0].mxu0
      %v1623 = vadd.f32 %v1504, %v1622
      %v1624 = vpop.f32.mrb[0].mxu0
      %1625 = vmatprep.mubr.bf16.mxu0 0
      %1626 = vmatmul.mubr.bf16.gmra.mrb[0].mxu0 %v1480
      %v1627 = vpop.f32.mrb[0].mxu0
      %v1628 = vadd.f32 %v1504, %v1627
      %v1629 = vpop.f32.mrb[0].mxu0
      %v1630 = vpop.f32.mrb[0].mxu0
      %v1631 = vadd.f32 %v1504, %v1630
      %v1632 = vpop.f32.mrb[0].mxu0
      %1633 = vmatprep.mubr.bf16.mxu0 0
      %1634 = vmatmul.mubr.bf16.gmra.mrb[0].mxu0 %v1481
      %v1635 = vpop.f32.mrb[0].mxu0
      %v1636 = vadd.f32 %v1504, %v1635
      %v1637 = vpop.f32.mrb[0].mxu0
      %v1638 = vpop.f32.mrb[0].mxu0
      %v1639 = vadd.f32 %v1504, %v1638
      %v1640 = vpop.f32.mrb[0].mxu0
      %1641 = vmatprep.mubr.bf16.mxu0 0
      %1642 = vmatmul.mubr.bf16.gmra.mrb[0].mxu0 %v1482
      %v1643 = vpop.f32.mrb[0].mxu0
      %v1644 = vadd.f32 %v1504, %v1643
      %v1645 = vpop.f32.mrb[0].mxu0
      %v1646 = vpop.f32.mrb[0].mxu0
      %v1647 = vadd.f32 %v1504, %v1646
      %v1648 = vpop.f32.mrb[0].mxu0
      %1649 = vdwg.mxu0
      %v1650 = vmax.f32 %v1588, 0.0
      %v1651 = vmax.f32 %v1591, 0.0
      %v1652 = vmax.f32 %v1596, 0.0
      %v1653 = vmax.f32 %v1599, 0.0
      %v1654 = vmax.f32 %v1604, 0.0
      %v1655 = vmax.f32 %v1607, 0.0
      %v1656 = vmax.f32 %v1612, 0.0
      %v1657 = vmax.f32 %v1615, 0.0
      %v1658 = vmax.f32 %v1620, 0.0
      %v1659 = vmax.f32 %v1623, 0.0
      %v1660 = vmax.f32 %v1628, 0.0
      %v1661 = vmax.f32 %v1631, 0.0
      %v1662 = vmax.f32 %v1636, 0.0
      %v1663 = vmax.f32 %v1639, 0.0
      %v1664 = vmax.f32 %v1644, 0.0
      %v1665 = vmax.f32 %v1647, 0.0
      %v1666 = vpack.c.bf16 %v1651, %v1650
      %v1667 = vpack.c.bf16 %v1653, %v1652
      %v1668 = vpack.c.bf16 %v1655, %v1654
      %v1669 = vpack.c.bf16 %v1657, %v1656
      %v1670 = vpack.c.bf16 %v1659, %v1658
      %v1671 = vpack.c.bf16 %v1661, %v1660
      %v1672 = vpack.c.bf16 %v1663, %v1662
      %v1673 = vpack.c.bf16 %v1665, %v1664
      %s1674 = scalar_lea.vmem %s2, 384
      %v1675 = vld [vmem:[%s1674] sm:$0xf]
      %v1676 = vld [vmem:[%s1674 + $0x4] sm:$0xf]
      %v1677 = vld [vmem:[%s1674 + $0x8] sm:$0xf]
      %v1678 = vld [vmem:[%s1674 + $0xc] sm:$0xf]
      %v1679 = vld [vmem:[%s1674 + $0x10] sm:$0xf]
      %v1680 = vld [vmem:[%s1674 + $0x14] sm:$0xf]
      %v1681 = vld [vmem:[%s1674 + $0x18] sm:$0xf]
      %v1682 = vld [vmem:[%s1674 + $0x1c] sm:$0xf]
      %v1683 = vld [vmem:[%s1674 + $0x20] sm:$0xf]
      %v1684 = vld [vmem:[%s1674 + $0x24] sm:$0xf]
      %v1685 = vld [vmem:[%s1674 + $0x28] sm:$0xf]
      %v1686 = vld [vmem:[%s1674 + $0x2c] sm:$0xf]
      %v1687 = vld [vmem:[%s1674 + $0x30] sm:$0xf]
      %v1688 = vld [vmem:[%s1674 + $0x34] sm:$0xf]
      %v1689 = vld [vmem:[%s1674 + $0x38] sm:$0xf]
      %v1690 = vld [vmem:[%s1674 + $0x3c] sm:$0xf]
      %v1691 = vld [vmem:[%s3 + $0x6] sm:$0x1]
      %v1692 = vlaneseq
      %v1693 = vshrl.u32 %v1692, 7
      %v1694 = vsub.s32 0, %v1693
      %v1695 = vrot.slane %v1691, %v1694
      %v1712 = vunpack.c.l.b16 %v1675
      %v1713 = vunpack.c.l.b16 %v1676
      %v1714 = vunpack.c.l.b16 %v1677
      %v1715 = vunpack.c.l.b16 %v1678
      %v1716 = vunpack.c.l.b16 %v1679
      %v1717 = vunpack.c.l.b16 %v1680
      %v1718 = vunpack.c.l.b16 %v1681
      %v1719 = vunpack.c.l.b16 %v1682
      %v1720 = vunpack.c.l.b16 %v1683
      %v1721 = vunpack.c.l.b16 %v1684
      %v1722 = vunpack.c.l.b16 %v1685
      %v1723 = vunpack.c.l.b16 %v1686
      %v1724 = vunpack.c.l.b16 %v1687
      %v1725 = vunpack.c.l.b16 %v1688
      %v1726 = vunpack.c.l.b16 %v1689
      %v1727 = vunpack.c.l.b16 %v1690
      %v1728 = vpack.c.b16 %v1713, %v1712
      %v1729 = vpack.c.b16 %v1715, %v1714
      %v1730 = vpack.c.b16 %v1717, %v1716
      %v1731 = vpack.c.b16 %v1719, %v1718
      %v1732 = vpack.c.b16 %v1721, %v1720
      %v1733 = vpack.c.b16 %v1723, %v1722
      %v1734 = vpack.c.b16 %v1725, %v1724
      %v1735 = vpack.c.b16 %v1727, %v1726
      %1744 = vmatprep.subr.bf16.mxu0 0
      %1745 = vmatpush1.bf16.msra.mxu0 %v1728
      %1746 = vmatprep.subr.bf16.mxu0 0
      %1747 = vmatpush1.bf16.msra.mxu0 %v1729
      %1748 = vmatprep.subr.bf16.mxu0 0
      %1749 = vmatpush1.bf16.msra.mxu0 %v1730
      %1750 = vmatprep.subr.bf16.mxu0 0
      %1751 = vmatpush1.bf16.msra.mxu0 %v1731
      %1752 = vmatprep.subr.bf16.mxu0 0
      %1753 = vmatpush1.bf16.msra.mxu0 %v1732
      %1754 = vmatprep.subr.bf16.mxu0 0
      %1755 = vmatpush1.bf16.msra.mxu0 %v1733
      %1756 = vmatprep.subr.bf16.mxu0 0
      %1757 = vmatpush1.bf16.msra.mxu0 %v1734
      %1758 = vmatprep.subr.bf16.mxu0 0
      %1759 = vmatpush1.bf16.msra.mxu0 %v1735
      %1760 = vmatprep.subr.bf16.mxu0 0
      %1761 = vmatpush1.bf16.msra.mxu0 0
      %1762 = vmatprep.subr.bf16.mxu0 0
      %1763 = vmatpush1.bf16.msra.mxu0 0
      %1764 = vmatprep.subr.bf16.mxu0 0
      %1765 = vmatpush1.bf16.msra.mxu0 0
      %1766 = vmatprep.subr.bf16.mxu0 0
      %1767 = vmatpush1.bf16.msra.mxu0 0
      %1768 = vmatprep.subr.bf16.mxu0 0
      %1769 = vmatpush1.bf16.msra.mxu0 0
      %1770 = vmatprep.subr.bf16.mxu0 0
      %1771 = vmatpush1.bf16.msra.mxu0 0
      %1772 = vmatprep.subr.bf16.mxu0 0
      %1773 = vmatpush1.bf16.msra.mxu0 0
      %1774 = vmatprep.subr.bf16.mxu0 0
      %1775 = vmatpush1.bf16.msra.mxu0 0
      %1776 = vmatprep.mubr.bf16.mxu0 0
      %1777 = vmatmul.mubr.bf16.gmra.mrb[0].mxu0 %v1666
      %v1778 = vpop.f32.mrb[0].mxu0
      %v1779 = vadd.f32 %v1695, %v1778
      %v1780 = vpop.f32.mrb[0].mxu0
      %v1781 = vpop.f32.mrb[0].mxu0
      %v1782 = vadd.f32 %v1695, %v1781
      %v1783 = vpop.f32.mrb[0].mxu0
      %1784 = vmatprep.mubr.bf16.mxu0 0
      %1785 = vmatmul.mubr.bf16.gmra.mrb[0].mxu0 %v1667
      %v1786 = vpop.f32.mrb[0].mxu0
      %v1787 = vadd.f32 %v1695, %v1786
      %v1788 = vpop.f32.mrb[0].mxu0
      %v1789 = vpop.f32.mrb[0].mxu0
      %v1790 = vadd.f32 %v1695, %v1789
      %v1791 = vpop.f32.mrb[0].mxu0
      %1792 = vmatprep.mubr.bf16.mxu0 0
      %1793 = vmatmul.mubr.bf16.gmra.mrb[0].mxu0 %v1668
      %v1794 = vpop.f32.mrb[0].mxu0
      %v1795 = vadd.f32 %v1695, %v1794
      %v1796 = vpop.f32.mrb[0].mxu0
      %v1797 = vpop.f32.mrb[0].mxu0
      %v1798 = vadd.f32 %v1695, %v1797
      %v1799 = vpop.f32.mrb[0].mxu0
      %1800 = vmatprep.mubr.bf16.mxu0 0
      %1801 = vmatmul.mubr.bf16.gmra.mrb[0].mxu0 %v1669
      %v1802 = vpop.f32.mrb[0].mxu0
      %v1803 = vadd.f32 %v1695, %v1802
      %v1804 = vpop.f32.mrb[0].mxu0
      %v1805 = vpop.f32.mrb[0].mxu0
      %v1806 = vadd.f32 %v1695, %v1805
      %v1807 = vpop.f32.mrb[0].mxu0
      %1808 = vmatprep.mubr.bf16.mxu0 0
      %1809 = vmatmul.mubr.bf16.gmra.mrb[0].mxu0 %v1670
      %v1810 = vpop.f32.mrb[0].mxu0
      %v1811 = vadd.f32 %v1695, %v1810
      %v1812 = vpop.f32.mrb[0].mxu0
      %v1813 = vpop.f32.mrb[0].mxu0
      %v1814 = vadd.f32 %v1695, %v1813
      %v1815 = vpop.f32.mrb[0].mxu0
      %1816 = vmatprep.mubr.bf16.mxu0 0
      %1817 = vmatmul.mubr.bf16.gmra.mrb[0].mxu0 %v1671
      %v1818 = vpop.f32.mrb[0].mxu0
      %v1819 = vadd.f32 %v1695, %v1818
      %v1820 = vpop.f32.mrb[0].mxu0
      %v1821 = vpop.f32.mrb[0].mxu0
      %v1822 = vadd.f32 %v1695, %v1821
      %v1823 = vpop.f32.mrb[0].mxu0
      %1824 = vmatprep.mubr.bf16.mxu0 0
      %1825 = vmatmul.mubr.bf16.gmra.mrb[0].mxu0 %v1672
      %v1826 = vpop.f32.mrb[0].mxu0
      %v1827 = vadd.f32 %v1695, %v1826
      %v1828 = vpop.f32.mrb[0].mxu0
      %v1829 = vpop.f32.mrb[0].mxu0
      %v1830 = vadd.f32 %v1695, %v1829
      %v1831 = vpop.f32.mrb[0].mxu0
      %1832 = vmatprep.mubr.bf16.mxu0 0
      %1833 = vmatmul.mubr.bf16.gmra.mrb[0].mxu0 %v1673
      %v1834 = vpop.f32.mrb[0].mxu0
      %v1835 = vadd.f32 %v1695, %v1834
      %v1836 = vpop.f32.mrb[0].mxu0
      %v1837 = vpop.f32.mrb[0].mxu0
      %v1838 = vadd.f32 %v1695, %v1837
      %v1839 = vpop.f32.mrb[0].mxu0
      %1840 = vdwg.mxu0
      %v1841 = vmax.f32 %v1779, 0.0
      %v1842 = vmax.f32 %v1782, 0.0
      %v1843 = vmax.f32 %v1787, 0.0
      %v1844 = vmax.f32 %v1790, 0.0
      %v1845 = vmax.f32 %v1795, 0.0
      %v1846 = vmax.f32 %v1798, 0.0
      %v1847 = vmax.f32 %v1803, 0.0
      %v1848 = vmax.f32 %v1806, 0.0
      %v1849 = vmax.f32 %v1811, 0.0
      %v1850 = vmax.f32 %v1814, 0.0
      %v1851 = vmax.f32 %v1819, 0.0
      %v1852 = vmax.f32 %v1822, 0.0
      %v1853 = vmax.f32 %v1827, 0.0
      %v1854 = vmax.f32 %v1830, 0.0
      %v1855 = vmax.f32 %v1835, 0.0
      %v1856 = vmax.f32 %v1838, 0.0
      %1857 = vst [vmem:[%s256] sm:$0xff] %v1841
      %1858 = vst [vmem:[%s256 + $0x8] sm:$0xff] %v1842
      %1859 = vst [vmem:[%s256 + $0x10] sm:$0xff] %v1843
      %1860 = vst [vmem:[%s256 + $0x18] sm:$0xff] %v1844
      %1861 = vst [vmem:[%s256 + $0x20] sm:$0xff] %v1845
      %1862 = vst [vmem:[%s256 + $0x28] sm:$0xff] %v1846
      %1863 = vst [vmem:[%s256 + $0x30] sm:$0xff] %v1847
      %1864 = vst [vmem:[%s256 + $0x38] sm:$0xff] %v1848
      %1865 = vst [vmem:[%s256 + $0x40] sm:$0xff] %v1849
      %1866 = vst [vmem:[%s256 + $0x48] sm:$0xff] %v1850
      %1867 = vst [vmem:[%s256 + $0x50] sm:$0xff] %v1851
      %1868 = vst [vmem:[%s256 + $0x58] sm:$0xff] %v1852
      %1869 = vst [vmem:[%s256 + $0x60] sm:$0xff] %v1853
      %1870 = vst [vmem:[%s256 + $0x68] sm:$0xff] %v1854
      %1871 = vst [vmem:[%s256 + $0x70] sm:$0xff] %v1855
      %1872 = vst [vmem:[%s256 + $0x78] sm:$0xff] %v1856
      %s1873 = smul.u32 16, %s17
      %p1874 = scmp.lt.s32.totalorder %s1873, 31
      %s1875 = scalar_select %p1874, %s1873, 31
      %s1876 = smul.addr %s1875, 8
      %s1877 = scalar_lea.vmem %s4, %s1876
      %s1878 = smul.u32 16, %s17
      %p1879 = scmp.lt.s32.totalorder %s1878, 31
      %s1880 = scalar_select %p1879, %s1878, 31
      %s1881 = smul.addr %s1880, 8
      %s1882 = scalar_lea.vmem %s5, %s1881
      // Predicated region
      $region37: #{vae_forward.1} parent=35 // pred_check
        %p1883 = pneg %p129
      $region38: #{vae_forward.1} parent=35 // pred_check_branch
        %1885 = sbr.rel (%p1883) target = $region40
      $region39: #{vae_forward.1} parent=35 // pred_region
        %s1886 = smul.u32 16, %s17
      $region40: #{vae_forward.1} parent=35 // pred_fallthru
        _
      // Predicated region
      $region41: #{vae_forward.1} parent=35 // pred_check
        %p1887 = pneg %p155
      $region42: #{vae_forward.1} parent=35 // pred_check_branch
        %1889 = sbr.rel (%p1887) target = $region44
      $region43: #{vae_forward.1} parent=35 // pred_region
        %s1890 = smul.u32 16, %s17
      $region44: #{vae_forward.1} parent=35 // pred_fallthru
        _
    $region36: #{vae_forward.1} parent=5 // pred_fallthru
      _
    %p1891 = scmp.le.s32.totalorder 2, %s12
    // Predicated region
    $region45: #{vae_forward.1} parent=5 // pred_check
      %p1892 = pneg %p1891
    $region46: #{vae_forward.1} parent=5 // pred_check_branch
      %1894 = sbr.rel (%p1892) target = $region48
    $region47: #{vae_forward.1} parent=5 // pred_region
      %s1895 = ssub.s32 %s12, 2
      // Predicated region
      $region49: #{vae_forward.1} parent=47 // pred_check
        %p1896 = pneg %p135
      $region50: #{vae_forward.1} parent=47 // pred_check_branch
        %1898 = sbr.rel (%p1896) target = $region52
      $region51: #{vae_forward.1} parent=47 // pred_region
        %s1899 = smul.u32 16, %s18
        %p1900 = scmp.lt.s32.totalorder %s1899, 31
        %s1901 = scalar_select %p1900, %s1899, 31
        %s1902 = smul.addr %s1901, 8
        %s1903 = scalar_lea.vmem %s4, %s1902
      $region52: #{vae_forward.1} parent=47 // pred_fallthru
        _
      // Predicated region
      $region53: #{vae_forward.1} parent=47 // pred_check
        %p1904 = pneg %p161
      $region54: #{vae_forward.1} parent=47 // pred_check_branch
        %1906 = sbr.rel (%p1904) target = $region56
      $region55: #{vae_forward.1} parent=47 // pred_region
        %s1907 = smul.u32 16, %s18
        %p1908 = scmp.lt.s32.totalorder %s1907, 31
        %s1909 = scalar_select %p1908, %s1907, 31
        %s1910 = smul.addr %s1909, 8
        %s1911 = scalar_lea.vmem %s5, %s1910
      $region56: #{vae_forward.1} parent=47 // pred_fallthru
        _
    $region48: #{vae_forward.1} parent=5 // pred_fallthru
      _
  $region6: #{vae_forward.1} parent=0 // loop_footer
    %s16 = sadd.s32 1, %s12
  $region7: #{vae_forward.1} parent=0 // loop_footer_branch
    %11 = sbr.rel target = $region3
  $region8: #{vae_forward.1} parent=0 // loop_exit
    _

</llo_original>
